<compile_context>
chip_gen: v6e
topology: v6e:2x2x1
jax: 0.10.0
libtpu: 0.0.40
codegen_flags: <defaults>
</compile_context>

<pallas_src>
import functools
import math

import jax
import jax.numpy as jnp
from jax.experimental import pallas as pl
from jax.experimental.pallas import tpu as pltpu

# ----------------------------- config ---------------------------------------
VOCAB = 100
TYPE_VOCAB = 2
MAX_POS = 16
HIDDEN = 32
NUM_HEADS = 2
HEAD_DIM = HIDDEN // NUM_HEADS
INTERMEDIATE = 64
NUM_LAYERS = 2
EPS = 1e-12
LANE = 128
NEG = -1e9

# ---- f32 vector-slab row layout (per encoder): [rows, 128] -----------------
ROW_LN_EMB_G = 0
ROW_LN_EMB_B = 1
ROWS_PER_LAYER = 8                      # bqk, bo', ln1_g, ln1_b, b1, b2, ln2_g, ln2_b
STATIC_ROWS = 2 + NUM_LAYERS * ROWS_PER_LAYER
BIAS_BASE = ((STATIC_ROWS + 7) // 8) * 8          # attention-bias rows start here

# ---- bf16 weight-slab row layout (per encoder): [L*128, 128] ----------------
WROWS_QKVO = HIDDEN                      # fused [Wq | Wk | Wv@Wo] projection
WROWS_W1 = HIDDEN
WROWS_W2 = INTERMEDIATE
WROWS_PER_LAYER = WROWS_QKVO + WROWS_W1 + WROWS_W2     # 128
QKVO_LANES = (2 + NUM_HEADS) * HIDDEN                   # 128
assert QKVO_LANES <= LANE and INTERMEDIATE <= LANE and HIDDEN <= LANE


# ----------------------------- kernel ---------------------------------------
def _layer_norm(x, g, b):
    mu = jnp.mean(x, axis=-1, keepdims=True)
    var = jnp.mean(jnp.square(x - mu), axis=-1, keepdims=True)
    return (x - mu) * jax.lax.rsqrt(var + EPS) * g + b


def encoder_kernel(batch, seq, x_ref, vec_ref, w_ref, out_ref):
    B, S = batch, seq
    BS = B * S
    H, HD, NH, I = HIDDEN, HEAD_DIM, NUM_HEADS, INTERMEDIATE
    NHBS = NH * BS
    scale = 1.0 / math.sqrt(HD)
    bf16 = jnp.bfloat16

    vec = vec_ref[...]                                            # [rows, 128] f32
    # host-precomputed additive bias: cross-head + cross-batch + key padding
    bias_full = vec[BIAS_BASE:BIAS_BASE + NHBS, :NHBS]            # [NHBS, NHBS]

    # embedding layernorm (f32)
    h = _layer_norm(x_ref[...],
                    vec[ROW_LN_EMB_G:ROW_LN_EMB_G + 1, :H],
                    vec[ROW_LN_EMB_B:ROW_LN_EMB_B + 1, :H])       # [BS, H]

    for l in range(NUM_LAYERS):
        vb = 2 + l * ROWS_PER_LAYER
        b_qk = vec[vb + 0:vb + 1, :QKVO_LANES]     # q/k bias (vo lanes are zero)
        b_o = vec[vb + 1:vb + 2, :H]               # bo + sum_n bv_n @ Wo_n
        ln1_g = vec[vb + 2:vb + 3, :H]
        ln1_b = vec[vb + 3:vb + 4, :H]
        b_1 = vec[vb + 4:vb + 5, :I]
        b_2 = vec[vb + 5:vb + 6, :H]
        ln2_g = vec[vb + 6:vb + 7, :H]
        ln2_b = vec[vb + 7:vb + 8, :H]

        wb = l * WROWS_PER_LAYER
        w_qkvo = w_ref[wb:wb + WROWS_QKVO, :QKVO_LANES]                     # [H, 128] bf16
        w_1 = w_ref[wb + WROWS_QKVO:wb + WROWS_QKVO + WROWS_W1, :I]         # [H, I]  bf16
        w_2 = w_ref[wb + WROWS_QKVO + WROWS_W1:wb + WROWS_PER_LAYER, :H]    # [I, H]  bf16

        # ---- attention: one fused QKV/VO projection, one block-diag score
        #      matmul, one PV matmul (all heads + all sequences at once) ----
        qkvo = jnp.dot(h.astype(bf16), w_qkvo,
                       preferred_element_type=jnp.float32) + b_qk           # [BS, 128]

        # stack heads along the sublane (row) axis
        q_st = jnp.concatenate(
            [qkvo[:, n * HD:(n + 1) * HD] for n in range(NH)], axis=0)       # [NHBS, HD]
        k_st = jnp.concatenate(
            [qkvo[:, NH * HD + n * HD:NH * HD + (n + 1) * HD]
             for n in range(NH)], axis=0)                                     # [NHBS, HD]
        vo_st = jnp.concatenate(
            [qkvo[:, 2 * NH * HD + n * H:2 * NH * HD + (n + 1) * H]
             for n in range(NH)], axis=0)                                     # [NHBS, H]

        s = jnp.dot(q_st.astype(bf16), k_st.astype(bf16).T,
                    preferred_element_type=jnp.float32) * scale + bias_full   # [NHBS, NHBS]
        s = s - jnp.max(s, axis=-1, keepdims=True)
        p = jnp.exp(s)
        p = p * pl.reciprocal(jnp.sum(p, axis=-1, keepdims=True), approx=True)

        ctx = jnp.dot(p.astype(bf16), vo_st.astype(bf16),
                      preferred_element_type=jnp.float32)                     # [NHBS, H]
        attn = b_o
        for n in range(NH):                      # sum the per-head row blocks
            attn = attn + ctx[n * BS:(n + 1) * BS, :]
        h = _layer_norm(h + attn, ln1_g, ln1_b)

        # ---- feed-forward ----
        ff = jnp.dot(h.astype(bf16), w_1, preferred_element_type=jnp.float32) + b_1
        ff = jax.nn.gelu(ff, approximate=True)
        ff = jnp.dot(ff.astype(bf16), w_2, preferred_element_type=jnp.float32) + b_2
        h = _layer_norm(h + ff, ln2_g, ln2_b)

    out_ref[...] = h        # full [BS, H]; CLS rows are sliced wrapper-side


# ----------------------------- host-side packing (once, outside jit) --------
def pack_encoder_params(p):
    L, NH, H, HD, I = NUM_LAYERS, NUM_HEADS, HIDDEN, HEAD_DIM, INTERMEDIATE

    # fused projection weight per layer: lanes [Wq(per-head) | Wk(per-head) | Wv@Wo(per-head)]
    wq = p['wq'].transpose(0, 2, 1, 3).reshape(L, H, NH * HD)
    wk = p['wk'].transpose(0, 2, 1, 3).reshape(L, H, NH * HD)
    wvo = jnp.einsum('lnhd,lndk->lnhk', p['wv'], p['wo'])        # [L, NH, H, H]
    wvo = wvo.transpose(0, 2, 1, 3).reshape(L, H, NH * H)
    w_qkvo = jnp.concatenate([wq, wk, wvo], axis=-1)             # [L, H, 128]

    def pad_lanes(a):
        return jnp.pad(a, ((0, 0), (0, 0), (0, LANE - a.shape[-1])))

    # bf16 weight slab, rows per layer = [w_qkvo(H) | w1(H) | w2(I)]
    wslab = jnp.concatenate(
        [pad_lanes(w_qkvo), pad_lanes(p['w1']), pad_lanes(p['w2'])], axis=1)
    wslab = wslab.reshape(L * WROWS_PER_LAYER, LANE).astype(jnp.bfloat16)

    # f32 static vector slab
    slab = jnp.zeros((BIAS_BASE, LANE), jnp.float32)
    slab = slab.at[ROW_LN_EMB_G, :H].set(p['ln_emb_g'].reshape(H))
    slab = slab.at[ROW_LN_EMB_B, :H].set(p['ln_emb_b'].reshape(H))
    bq = p['bq'].reshape(L, NH * HD)
    bk = p['bk'].reshape(L, NH * HD)
    # bo' = bo + sum_n bv_n @ Wo_n  (exact: softmax rows sum to 1)
    bo_f = p['bo'].reshape(L, H) + jnp.einsum(
        'lnd,lndk->lk', p['bv'].reshape(L, NH, HD), p['wo'])
    for l in range(L):
        vb = 2 + l * ROWS_PER_LAYER
        slab = slab.at[vb + 0, :NH * HD].set(bq[l])
        slab = slab.at[vb + 0, NH * HD:2 * NH * HD].set(bk[l])
        slab = slab.at[vb + 1, :H].set(bo_f[l])
        slab = slab.at[vb + 2, :H].set(p['ln1_g'][l].reshape(H))
        slab = slab.at[vb + 3, :H].set(p['ln1_b'][l].reshape(H))
        slab = slab.at[vb + 4, :I].set(p['b1'][l].reshape(I))
        slab = slab.at[vb + 5, :H].set(p['b2'][l].reshape(H))
        slab = slab.at[vb + 6, :H].set(p['ln2_g'][l].reshape(H))
        slab = slab.at[vb + 7, :H].set(p['ln2_b'][l].reshape(H))

    return dict(wslab=wslab, vec_static=slab,
                word_emb=p['word_emb'], pos_emb=p['pos_emb'],
                type_emb=p['type_emb'])


def pack_dual_encoder(q_params, d_params):
    qp = pack_encoder_params(q_params)
    dp = pack_encoder_params(d_params)
    return dict(
        wslab=jnp.stack([qp['wslab'], dp['wslab']]),            # [2, L*128, 128] bf16
        vec_static=jnp.stack([qp['vec_static'], dp['vec_static']]),
        word_emb=jnp.stack([qp['word_emb'], dp['word_emb']]),
        pos_emb=jnp.stack([qp['pos_emb'], dp['pos_emb']]),
        type_emb=jnp.stack([qp['type_emb'], dp['type_emb']]),
    )


# ----------------------------- per-call (jit) glue ---------------------------
def _attn_bias(mask, B, S):
    """[NH*BS, NH*BS] additive bias: cross-head + cross-batch + key padding."""
    BS = B * S
    key_bias = (1.0 - mask.astype(jnp.float32).reshape(1, BS)) * NEG
    seq_id = jnp.arange(BS) // S
    blk = jnp.where(seq_id[:, None] == seq_id[None, :],
                    jnp.broadcast_to(key_bias, (BS, BS)), NEG)     # [BS, BS]
    full = jnp.full((NUM_HEADS * BS, NUM_HEADS * BS), NEG, jnp.float32)
    for n in range(NUM_HEADS):
        full = full.at[n * BS:(n + 1) * BS, n * BS:(n + 1) * BS].set(blk)
    return full


def _build_vec(vec_static, mask, B, S):
    NHBS = NUM_HEADS * B * S
    rows_pad = ((BIAS_BASE + NHBS + 7) // 8) * 8
    bias = jnp.pad(_attn_bias(mask, B, S),
                   ((0, rows_pad - BIAS_BASE - NHBS), (0, LANE - NHBS)))
    return jnp.concatenate([vec_static, bias], axis=0)             # [rows_pad, 128]


def _embed(packed, e, ids, tt):
    B, S = ids.shape
    x = (packed['word_emb'][e][ids]
         + packed['pos_emb'][e][jnp.arange(S)][None, :, :]
         + packed['type_emb'][e][tt])
    return x.reshape(B * S, HIDDEN).astype(jnp.float32)


def _pad2d(a, B, S):
    b, s = a.shape
    return jnp.pad(a, ((0, B - b), (0, S - s)))


@jax.jit
def dual_encoder_forward(packed, q_ids, q_mask, q_tt, d_ids, d_mask, d_tt):
    Bq, Sq = q_ids.shape
    Bd, Sd = d_ids.shape
    # Always take the fused grid=(2,) path: pad to a common (B, S).
    B, S = max(Bq, Bd), max(Sq, Sd)
    BS = B * S
    assert S <= MAX_POS and NUM_HEADS * BS <= LANE, "toy-size slab limits exceeded"

    q_ids_p, d_ids_p = _pad2d(q_ids, B, S), _pad2d(d_ids, B, S)
    q_tt_p, d_tt_p = _pad2d(q_tt, B, S), _pad2d(d_tt, B, S)
    q_mask_p, d_mask_p = _pad2d(q_mask, B, S), _pad2d(d_mask, B, S)

    x = jnp.stack([_embed(packed, 0, q_ids_p, q_tt_p),
                   _embed(packed, 1, d_ids_p, d_tt_p)])                     # [2, BS, H]
    vec = jnp.stack([_build_vec(packed['vec_static'][0], q_mask_p, B, S),
                     _build_vec(packed['vec_static'][1], d_mask_p, B, S)])  # [2, R, 128]
    w = packed['wslab']                                                     # [2, WR, 128]
    R, WR = vec.shape[1], w.shape[1]

    # NOTE: on single-TC v5e/v6e the "parallel" encoder axis is just a 2-step
    # loop; collapsing E into the matmul row axis there was skipped to keep a
    # single code path that parallelizes across the two TCs on v7x.
    out = pl.pallas_call(
        functools.partial(encoder_kernel, B, S),
        out_shape=jax.ShapeDtypeStruct((2, BS, HIDDEN), jnp.float32),
        grid=(2,),
        in_specs=[
            pl.BlockSpec((None, BS, HIDDEN), lambda e: (e, 0, 0)),
            pl.BlockSpec((None, R, LANE), lambda e: (e, 0, 0)),
            pl.BlockSpec((None, WR, LANE), lambda e: (e, 0, 0)),
        ],
        out_specs=pl.BlockSpec((None, BS, HIDDEN), lambda e: (e, 0, 0)),
        compiler_params=pltpu.CompilerParams(
            dimension_semantics=("parallel",)),
    )(x, vec, w)                                                            # [2, BS, H]

    q_emb = out[0].reshape(B, S, HIDDEN)[:Bq, 0, :]      # CLS sliced wrapper-side
    d_emb = out[1].reshape(B, S, HIDDEN)[:Bd, 0, :]
    return q_emb, d_emb


# ----------------------------- params ---------------------------------------
def init_encoder_params(key):
    keys = jax.random.split(key, 18)
    std = 0.02

    def nrm(k, shape):
        return (std * jax.random.normal(k, shape)).astype(jnp.float32)

    L, NH, H, HD, I = NUM_LAYERS, NUM_HEADS, HIDDEN, HEAD_DIM, INTERMEDIATE
    return dict(
        word_emb=nrm(keys[0], (VOCAB, H)),
        pos_emb=nrm(keys[1], (MAX_POS, H)),
        type_emb=nrm(keys[2], (TYPE_VOCAB, H)),
        ln_emb_g=jnp.ones((1, H), jnp.float32),
        ln_emb_b=jnp.zeros((1, H), jnp.float32),
        wq=nrm(keys[3], (L, NH, H, HD)), bq=nrm(keys[4], (L, NH, 1, HD)),
        wk=nrm(keys[5], (L, NH, H, HD)), bk=nrm(keys[6], (L, NH, 1, HD)),
        wv=nrm(keys[7], (L, NH, H, HD)), bv=nrm(keys[8], (L, NH, 1, HD)),
        wo=nrm(keys[9], (L, NH, HD, H)), bo=nrm(keys[10], (L, 1, H)),
        ln1_g=jnp.ones((L, 1, H), jnp.float32),
        ln1_b=jnp.zeros((L, 1, H), jnp.float32),
        w1=nrm(keys[11], (L, H, I)), b1=nrm(keys[12], (L, 1, I)),
        w2=nrm(keys[13], (L, I, H)), b2=nrm(keys[14], (L, 1, H)),
        ln2_g=jnp.ones((L, 1, H), jnp.float32),
        ln2_b=jnp.zeros((L, 1, H), jnp.float32),
    )


# ----------------------------- pure-JAX reference ----------------------------
def encoder_ref(params, input_ids, attention_mask, token_type_ids):
    B, S = input_ids.shape
    x = (params['word_emb'][input_ids]
         + params['pos_emb'][jnp.arange(S)][None]
         + params['type_emb'][token_type_ids]).astype(jnp.float32)

    def ln(x, g, b):
        mu = jnp.mean(x, axis=-1, keepdims=True)
        var = jnp.mean(jnp.square(x - mu), axis=-1, keepdims=True)
        return (x - mu) * jax.lax.rsqrt(var + EPS) * g + b

    h = ln(x, params['ln_emb_g'][0], params['ln_emb_b'][0])
    bias = (1.0 - attention_mask.astype(jnp.float32)) * NEG
    for l in range(NUM_LAYERS):
        attn = jnp.zeros_like(h)
        for n in range(NUM_HEADS):
            q = h @ params['wq'][l, n] + params['bq'][l, n]
            k = h @ params['wk'][l, n] + params['bk'][l, n]
            v = h @ params['wv'][l, n] + params['bv'][l, n]
            s = jnp.einsum('bqd,bkd->bqk', q, k) / math.sqrt(HEAD_DIM)
            s = s + bias[:, None, :]
            p = jax.nn.softmax(s, axis=-1)
            ctx = jnp.einsum('bqk,bkd->bqd', p, v)
            attn = attn + ctx @ params['wo'][l, n]
        attn = attn + params['bo'][l]
        h = ln(h + attn, params['ln1_g'][l], params['ln1_b'][l])
        ff = jax.nn.gelu(h @ params['w1'][l] + params['b1'][l], approximate=True)
        ff = ff @ params['w2'][l] + params['b2'][l]
        h = ln(h + ff, params['ln2_g'][l], params['ln2_b'][l])
    return h[:, 0, :]


# ----------------------------- main ------------------------------------------
if __name__ == "__main__":
    key = jax.random.PRNGKey(0)
    kq, kd, k1, k2 = jax.random.split(key, 4)
    q_params = init_encoder_params(kq)
    d_params = init_encoder_params(kd)

    Bq, Sq = 2, 8
    Bd, Sd = 2, 8
    q_ids = jax.random.randint(k1, (Bq, Sq), 0, VOCAB)
    d_ids = jax.random.randint(k2, (Bd, Sd), 0, VOCAB)
    q_mask = jnp.ones((Bq, Sq), jnp.int32).at[:, Sq - 2:].set(0)   # some padding
    d_mask = jnp.ones((Bd, Sd), jnp.int32)
    q_tt = jnp.zeros((Bq, Sq), jnp.int32)
    d_tt = jnp.zeros((Bd, Sd), jnp.int32)

    packed = pack_dual_encoder(q_params, d_params)   # once, outside jit

    q_emb, d_emb = dual_encoder_forward(packed, q_ids, q_mask, q_tt,
                                        d_ids, d_mask, d_tt)
    jax.block_until_ready((q_emb, d_emb))

    # correctness check vs pure-JAX f32 reference (tolerance covers bf16
    # matmul operands, host-side Wv@Wo folding and the approx reciprocal)
    q_ref = encoder_ref(q_params, q_ids, q_mask, q_tt)
    d_ref = encoder_ref(d_params, d_ids, d_mask, d_tt)
    assert q_emb.shape == (Bq, HIDDEN) and d_emb.shape == (Bd, HIDDEN)
    assert jnp.allclose(q_emb, q_ref, atol=2e-3, rtol=2e-3), \
        float(jnp.max(jnp.abs(q_emb - q_ref)))
    assert jnp.allclose(d_emb, d_ref, atol=2e-3, rtol=2e-3), \
        float(jnp.max(jnp.abs(d_emb - d_ref)))

    print("KERNEL_OK")
</pallas_src>

<mosaic_0001>
module attributes {stable_mosaic.version = 11 : i64} {
  func.func @encoder_kernel(%arg0: i32, %arg1: memref<1x16x32xf32, #tpu.memory_space<vmem>>, %arg2: memref<1x56x128xf32, #tpu.memory_space<vmem>>, %arg3: memref<1x256x128xbf16, #tpu.memory_space<vmem>>, %arg4: memref<1x16x32xf32, #tpu.memory_space<vmem>>) attributes {dimension_semantics = [#tpu.dimension_semantics<parallel>], iteration_bounds = array<i64: 2>, scalar_prefetch = 0 : i64, scratch_operands = 0 : i64, tpu.core_type = #tpu.core_type<tc>, window_params = [{transform_indices = @transform_0, window_bounds = array<i64: 1, 16, 32>}, {transform_indices = @transform_1, window_bounds = array<i64: 1, 56, 128>}, {transform_indices = @transform_2, window_bounds = array<i64: 1, 256, 128>}, {transform_indices = @transform_3, window_bounds = array<i64: 1, 16, 32>}]} {
    %c0 = arith.constant 0 : index
    %c0_0 = arith.constant 0 : index
    %c0_1 = arith.constant 0 : index
    %0 = vector.load %arg2[%c0, %c0_0, %c0_1] : memref<1x56x128xf32, #tpu.memory_space<vmem>>, vector<1x56x128xf32>
    %1 = vector.shape_cast %0 : vector<1x56x128xf32> to vector<56x128xf32>
    %2 = vector.extract_strided_slice %1 {offsets = [24, 0], sizes = [32, 32], strides = [1, 1]} : vector<56x128xf32> to vector<32x32xf32>
    %c0_2 = arith.constant 0 : index
    %c0_3 = arith.constant 0 : index
    %c0_4 = arith.constant 0 : index
    %3 = vector.load %arg1[%c0_2, %c0_3, %c0_4] : memref<1x16x32xf32, #tpu.memory_space<vmem>>, vector<1x16x32xf32>
    %4 = vector.shape_cast %3 : vector<1x16x32xf32> to vector<16x32xf32>
    %5 = vector.extract_strided_slice %1 {offsets = [0, 0], sizes = [1, 32], strides = [1, 1]} : vector<56x128xf32> to vector<1x32xf32>
    %6 = vector.extract_strided_slice %1 {offsets = [1, 0], sizes = [1, 32], strides = [1, 1]} : vector<56x128xf32> to vector<1x32xf32>
    %cst = arith.constant dense<0.000000e+00> : vector<16xf32>
    %7 = vector.multi_reduction <add>, %4, %cst [1] : vector<16x32xf32> to vector<16xf32>
    %8 = vector.shape_cast %7 : vector<16xf32> to vector<16x1xf32>
    %cst_5 = arith.constant 3.200000e+01 : f32
    %9 = vector.broadcast %cst_5 : f32 to vector<16x1xf32>
    %10 = arith.divf %8, %9 : vector<16x1xf32>
    %11 = vector.broadcast %10 : vector<16x1xf32> to vector<16x32xf32>
    %12 = arith.subf %4, %11 : vector<16x32xf32>
    %13 = arith.mulf %12, %12 : vector<16x32xf32>
    %cst_6 = arith.constant dense<0.000000e+00> : vector<16xf32>
    %14 = vector.multi_reduction <add>, %13, %cst_6 [1] : vector<16x32xf32> to vector<16xf32>
    %15 = vector.shape_cast %14 : vector<16xf32> to vector<16x1xf32>
    %cst_7 = arith.constant 3.200000e+01 : f32
    %16 = vector.broadcast %cst_7 : f32 to vector<16x1xf32>
    %17 = arith.divf %15, %16 : vector<16x1xf32>
    %18 = vector.broadcast %10 : vector<16x1xf32> to vector<16x32xf32>
    %19 = arith.subf %4, %18 : vector<16x32xf32>
    %cst_8 = arith.constant 9.99999996E-13 : f32
    %20 = vector.broadcast %cst_8 : f32 to vector<16x1xf32>
    %21 = arith.addf %17, %20 : vector<16x1xf32>
    %22 = math.rsqrt %21 : vector<16x1xf32>
    %23 = vector.broadcast %22 : vector<16x1xf32> to vector<16x32xf32>
    %24 = arith.mulf %19, %23 : vector<16x32xf32>
    %25 = vector.broadcast %5 : vector<1x32xf32> to vector<16x32xf32>
    %26 = arith.mulf %24, %25 : vector<16x32xf32>
    %27 = vector.broadcast %6 : vector<1x32xf32> to vector<16x32xf32>
    %28 = arith.addf %26, %27 : vector<16x32xf32>
    %29 = vector.extract_strided_slice %1 {offsets = [2, 0], sizes = [1, 128], strides = [1, 1]} : vector<56x128xf32> to vector<1x128xf32>
    %30 = vector.extract_strided_slice %1 {offsets = [3, 0], sizes = [1, 32], strides = [1, 1]} : vector<56x128xf32> to vector<1x32xf32>
    %31 = vector.extract_strided_slice %1 {offsets = [4, 0], sizes = [1, 32], strides = [1, 1]} : vector<56x128xf32> to vector<1x32xf32>
    %32 = vector.extract_strided_slice %1 {offsets = [5, 0], sizes = [1, 32], strides = [1, 1]} : vector<56x128xf32> to vector<1x32xf32>
    %33 = vector.extract_strided_slice %1 {offsets = [6, 0], sizes = [1, 64], strides = [1, 1]} : vector<56x128xf32> to vector<1x64xf32>
    %34 = vector.extract_strided_slice %1 {offsets = [7, 0], sizes = [1, 32], strides = [1, 1]} : vector<56x128xf32> to vector<1x32xf32>
    %35 = vector.extract_strided_slice %1 {offsets = [8, 0], sizes = [1, 32], strides = [1, 1]} : vector<56x128xf32> to vector<1x32xf32>
    %36 = vector.extract_strided_slice %1 {offsets = [9, 0], sizes = [1, 32], strides = [1, 1]} : vector<56x128xf32> to vector<1x32xf32>
    %c0_9 = arith.constant 0 : index
    %c0_10 = arith.constant 0 : index
    %c0_11 = arith.constant 0 : index
    %37 = vector.load %arg3[%c0_9, %c0_10, %c0_11] : memref<1x256x128xbf16, #tpu.memory_space<vmem>>, vector<1x32x128xbf16>
    %38 = vector.shape_cast %37 : vector<1x32x128xbf16> to vector<32x128xbf16>
    %c0_12 = arith.constant 0 : index
    %c32 = arith.constant 32 : index
    %c0_13 = arith.constant 0 : index
    %39 = vector.load %arg3[%c0_12, %c32, %c0_13] : memref<1x256x128xbf16, #tpu.memory_space<vmem>>, vector<1x32x64xbf16>
    %40 = vector.shape_cast %39 : vector<1x32x64xbf16> to vector<32x64xbf16>
    %c0_14 = arith.constant 0 : index
    %c64 = arith.constant 64 : index
    %c0_15 = arith.constant 0 : index
    %41 = vector.load %arg3[%c0_14, %c64, %c0_15] : memref<1x256x128xbf16, #tpu.memory_space<vmem>>, vector<1x64x32xbf16>
    %42 = vector.shape_cast %41 : vector<1x64x32xbf16> to vector<64x32xbf16>
    %43 = arith.truncf %28 : vector<16x32xf32> to vector<16x32xbf16>
    %cst_16 = arith.constant dense<0.000000e+00> : vector<16x128xf32>
    %44 = tpu.matmul %43, %38, %cst_16 {dimension_numbers = #tpu.dot_dimension_numbers<[1], [0], [0], [1], [0, 0, 1, 1], [], []>} : vector<16x32xbf16>, vector<32x128xbf16>, vector<16x128xf32> -> vector<16x128xf32>
    %45 = vector.broadcast %29 : vector<1x128xf32> to vector<16x128xf32>
    %46 = arith.addf %44, %45 : vector<16x128xf32>
    %47 = vector.extract_strided_slice %46 {offsets = [0, 0], sizes = [16, 16], strides = [1, 1]} : vector<16x128xf32> to vector<16x16xf32>
    %48 = vector.extract_strided_slice %46 {offsets = [0, 16], sizes = [16, 16], strides = [1, 1]} : vector<16x128xf32> to vector<16x16xf32>
    %49 = tpu.concatenate %47, %48 in 0 : vector<16x16xf32>, vector<16x16xf32> -> vector<32x16xf32>
    %50 = vector.extract_strided_slice %46 {offsets = [0, 32], sizes = [16, 16], strides = [1, 1]} : vector<16x128xf32> to vector<16x16xf32>
    %51 = vector.extract_strided_slice %46 {offsets = [0, 48], sizes = [16, 16], strides = [1, 1]} : vector<16x128xf32> to vector<16x16xf32>
    %52 = tpu.concatenate %50, %51 in 0 : vector<16x16xf32>, vector<16x16xf32> -> vector<32x16xf32>
    %53 = vector.extract_strided_slice %46 {offsets = [0, 64], sizes = [16, 32], strides = [1, 1]} : vector<16x128xf32> to vector<16x32xf32>
    %54 = vector.extract_strided_slice %46 {offsets = [0, 96], sizes = [16, 32], strides = [1, 1]} : vector<16x128xf32> to vector<16x32xf32>
    %55 = tpu.concatenate %53, %54 in 0 : vector<16x32xf32>, vector<16x32xf32> -> vector<32x32xf32>
    %56 = arith.truncf %49 : vector<32x16xf32> to vector<32x16xbf16>
    %57 = arith.truncf %52 : vector<32x16xf32> to vector<32x16xbf16>
    %58 = tpu.transpose %57, [1, 0] : vector<32x16xbf16> -> vector<16x32xbf16>
    %cst_17 = arith.constant dense<0.000000e+00> : vector<32x32xf32>
    %59 = tpu.matmul %56, %58, %cst_17 {dimension_numbers = #tpu.dot_dimension_numbers<[1], [0], [0], [1], [0, 0, 1, 1], [], []>} : vector<32x16xbf16>, vector<16x32xbf16>, vector<32x32xf32> -> vector<32x32xf32>
    %cst_18 = arith.constant 2.500000e-01 : f32
    %60 = vector.broadcast %cst_18 : f32 to vector<32x32xf32>
    %61 = arith.mulf %59, %60 : vector<32x32xf32>
    %62 = arith.addf %61, %2 : vector<32x32xf32>
    %cst_19 = arith.constant dense<0xFF800000> : vector<32xf32>
    %63 = vector.multi_reduction <maximumf>, %62, %cst_19 [1] : vector<32x32xf32> to vector<32xf32>
    %64 = vector.shape_cast %63 : vector<32xf32> to vector<32x1xf32>
    %65 = vector.broadcast %64 : vector<32x1xf32> to vector<32x32xf32>
    %66 = arith.subf %62, %65 : vector<32x32xf32>
    %67 = math.exp %66 : vector<32x32xf32>
    %cst_20 = arith.constant dense<0.000000e+00> : vector<32xf32>
    %68 = vector.multi_reduction <add>, %67, %cst_20 [1] : vector<32x32xf32> to vector<32xf32>
    %69 = vector.shape_cast %68 : vector<32xf32> to vector<32x1xf32>
    %70 = tpu.reciprocal %69 {approx = true} : vector<32x1xf32> -> vector<32x1xf32>
    %71 = vector.broadcast %70 : vector<32x1xf32> to vector<32x32xf32>
    %72 = arith.mulf %67, %71 : vector<32x32xf32>
    %73 = arith.truncf %72 : vector<32x32xf32> to vector<32x32xbf16>
    %74 = arith.truncf %55 : vector<32x32xf32> to vector<32x32xbf16>
    %cst_21 = arith.constant dense<0.000000e+00> : vector<32x32xf32>
    %75 = tpu.matmul %73, %74, %cst_21 {dimension_numbers = #tpu.dot_dimension_numbers<[1], [0], [0], [1], [0, 0, 1, 1], [], []>} : vector<32x32xbf16>, vector<32x32xbf16>, vector<32x32xf32> -> vector<32x32xf32>
    %76 = vector.extract_strided_slice %75 {offsets = [0, 0], sizes = [16, 32], strides = [1, 1]} : vector<32x32xf32> to vector<16x32xf32>
    %77 = vector.broadcast %30 : vector<1x32xf32> to vector<16x32xf32>
    %78 = arith.addf %77, %76 : vector<16x32xf32>
    %79 = vector.extract_strided_slice %75 {offsets = [16, 0], sizes = [16, 32], strides = [1, 1]} : vector<32x32xf32> to vector<16x32xf32>
    %80 = arith.addf %78, %79 : vector<16x32xf32>
    %81 = arith.addf %28, %80 : vector<16x32xf32>
    %cst_22 = arith.constant dense<0.000000e+00> : vector<16xf32>
    %82 = vector.multi_reduction <add>, %81, %cst_22 [1] : vector<16x32xf32> to vector<16xf32>
    %83 = vector.shape_cast %82 : vector<16xf32> to vector<16x1xf32>
    %cst_23 = arith.constant 3.200000e+01 : f32
    %84 = vector.broadcast %cst_23 : f32 to vector<16x1xf32>
    %85 = arith.divf %83, %84 : vector<16x1xf32>
    %86 = vector.broadcast %85 : vector<16x1xf32> to vector<16x32xf32>
    %87 = arith.subf %81, %86 : vector<16x32xf32>
    %88 = arith.mulf %87, %87 : vector<16x32xf32>
    %cst_24 = arith.constant dense<0.000000e+00> : vector<16xf32>
    %89 = vector.multi_reduction <add>, %88, %cst_24 [1] : vector<16x32xf32> to vector<16xf32>
    %90 = vector.shape_cast %89 : vector<16xf32> to vector<16x1xf32>
    %cst_25 = arith.constant 3.200000e+01 : f32
    %91 = vector.broadcast %cst_25 : f32 to vector<16x1xf32>
    %92 = arith.divf %90, %91 : vector<16x1xf32>
    %93 = vector.broadcast %85 : vector<16x1xf32> to vector<16x32xf32>
    %94 = arith.subf %81, %93 : vector<16x32xf32>
    %cst_26 = arith.constant 9.99999996E-13 : f32
    %95 = vector.broadcast %cst_26 : f32 to vector<16x1xf32>
    %96 = arith.addf %92, %95 : vector<16x1xf32>
    %97 = math.rsqrt %96 : vector<16x1xf32>
    %98 = vector.broadcast %97 : vector<16x1xf32> to vector<16x32xf32>
    %99 = arith.mulf %94, %98 : vector<16x32xf32>
    %100 = vector.broadcast %31 : vector<1x32xf32> to vector<16x32xf32>
    %101 = arith.mulf %99, %100 : vector<16x32xf32>
    %102 = vector.broadcast %32 : vector<1x32xf32> to vector<16x32xf32>
    %103 = arith.addf %101, %102 : vector<16x32xf32>
    %104 = arith.truncf %103 : vector<16x32xf32> to vector<16x32xbf16>
    %cst_27 = arith.constant dense<0.000000e+00> : vector<16x64xf32>
    %105 = tpu.matmul %104, %40, %cst_27 {dimension_numbers = #tpu.dot_dimension_numbers<[1], [0], [0], [1], [0, 0, 1, 1], [], []>} : vector<16x32xbf16>, vector<32x64xbf16>, vector<16x64xf32> -> vector<16x64xf32>
    %106 = vector.broadcast %33 : vector<1x64xf32> to vector<16x64xf32>
    %107 = arith.addf %105, %106 : vector<16x64xf32>
    %108 = arith.mulf %107, %107 : vector<16x64xf32>
    %109 = arith.mulf %107, %108 : vector<16x64xf32>
    %cst_28 = arith.constant 4.471500e-02 : f32
    %110 = vector.broadcast %cst_28 : f32 to vector<16x64xf32>
    %111 = arith.mulf %110, %109 : vector<16x64xf32>
    %112 = arith.addf %107, %111 : vector<16x64xf32>
    %cst_29 = arith.constant 0.797884583 : f32
    %113 = vector.broadcast %cst_29 : f32 to vector<16x64xf32>
    %114 = arith.mulf %113, %112 : vector<16x64xf32>
    %115 = math.tanh %114 : vector<16x64xf32>
    %cst_30 = arith.constant 1.000000e+00 : f32
    %116 = vector.broadcast %cst_30 : f32 to vector<16x64xf32>
    %117 = arith.addf %116, %115 : vector<16x64xf32>
    %cst_31 = arith.constant 5.000000e-01 : f32
    %118 = vector.broadcast %cst_31 : f32 to vector<16x64xf32>
    %119 = arith.mulf %118, %117 : vector<16x64xf32>
    %120 = arith.mulf %107, %119 : vector<16x64xf32>
    %121 = arith.truncf %120 : vector<16x64xf32> to vector<16x64xbf16>
    %cst_32 = arith.constant dense<0.000000e+00> : vector<16x32xf32>
    %122 = tpu.matmul %121, %42, %cst_32 {dimension_numbers = #tpu.dot_dimension_numbers<[1], [0], [0], [1], [0, 0, 1, 1], [], []>} : vector<16x64xbf16>, vector<64x32xbf16>, vector<16x32xf32> -> vector<16x32xf32>
    %123 = vector.broadcast %34 : vector<1x32xf32> to vector<16x32xf32>
    %124 = arith.addf %122, %123 : vector<16x32xf32>
    %125 = arith.addf %103, %124 : vector<16x32xf32>
    %cst_33 = arith.constant dense<0.000000e+00> : vector<16xf32>
    %126 = vector.multi_reduction <add>, %125, %cst_33 [1] : vector<16x32xf32> to vector<16xf32>
    %127 = vector.shape_cast %126 : vector<16xf32> to vector<16x1xf32>
    %cst_34 = arith.constant 3.200000e+01 : f32
    %128 = vector.broadcast %cst_34 : f32 to vector<16x1xf32>
    %129 = arith.divf %127, %128 : vector<16x1xf32>
    %130 = vector.broadcast %129 : vector<16x1xf32> to vector<16x32xf32>
    %131 = arith.subf %125, %130 : vector<16x32xf32>
    %132 = arith.mulf %131, %131 : vector<16x32xf32>
    %cst_35 = arith.constant dense<0.000000e+00> : vector<16xf32>
    %133 = vector.multi_reduction <add>, %132, %cst_35 [1] : vector<16x32xf32> to vector<16xf32>
    %134 = vector.shape_cast %133 : vector<16xf32> to vector<16x1xf32>
    %cst_36 = arith.constant 3.200000e+01 : f32
    %135 = vector.broadcast %cst_36 : f32 to vector<16x1xf32>
    %136 = arith.divf %134, %135 : vector<16x1xf32>
    %137 = vector.broadcast %129 : vector<16x1xf32> to vector<16x32xf32>
    %138 = arith.subf %125, %137 : vector<16x32xf32>
    %cst_37 = arith.constant 9.99999996E-13 : f32
    %139 = vector.broadcast %cst_37 : f32 to vector<16x1xf32>
    %140 = arith.addf %136, %139 : vector<16x1xf32>
    %141 = math.rsqrt %140 : vector<16x1xf32>
    %142 = vector.broadcast %141 : vector<16x1xf32> to vector<16x32xf32>
    %143 = arith.mulf %138, %142 : vector<16x32xf32>
    %144 = vector.broadcast %35 : vector<1x32xf32> to vector<16x32xf32>
    %145 = arith.mulf %143, %144 : vector<16x32xf32>
    %146 = vector.broadcast %36 : vector<1x32xf32> to vector<16x32xf32>
    %147 = arith.addf %145, %146 : vector<16x32xf32>
    %148 = vector.extract_strided_slice %1 {offsets = [10, 0], sizes = [1, 128], strides = [1, 1]} : vector<56x128xf32> to vector<1x128xf32>
    %149 = vector.extract_strided_slice %1 {offsets = [11, 0], sizes = [1, 32], strides = [1, 1]} : vector<56x128xf32> to vector<1x32xf32>
    %150 = vector.extract_strided_slice %1 {offsets = [12, 0], sizes = [1, 32], strides = [1, 1]} : vector<56x128xf32> to vector<1x32xf32>
    %151 = vector.extract_strided_slice %1 {offsets = [13, 0], sizes = [1, 32], strides = [1, 1]} : vector<56x128xf32> to vector<1x32xf32>
    %152 = vector.extract_strided_slice %1 {offsets = [14, 0], sizes = [1, 64], strides = [1, 1]} : vector<56x128xf32> to vector<1x64xf32>
    %153 = vector.extract_strided_slice %1 {offsets = [15, 0], sizes = [1, 32], strides = [1, 1]} : vector<56x128xf32> to vector<1x32xf32>
    %154 = vector.extract_strided_slice %1 {offsets = [16, 0], sizes = [1, 32], strides = [1, 1]} : vector<56x128xf32> to vector<1x32xf32>
    %155 = vector.extract_strided_slice %1 {offsets = [17, 0], sizes = [1, 32], strides = [1, 1]} : vector<56x128xf32> to vector<1x32xf32>
    %c0_38 = arith.constant 0 : index
    %c128 = arith.constant 128 : index
    %c0_39 = arith.constant 0 : index
    %156 = vector.load %arg3[%c0_38, %c128, %c0_39] : memref<1x256x128xbf16, #tpu.memory_space<vmem>>, vector<1x32x128xbf16>
    %157 = vector.shape_cast %156 : vector<1x32x128xbf16> to vector<32x128xbf16>
    %c0_40 = arith.constant 0 : index
    %c160 = arith.constant 160 : index
    %c0_41 = arith.constant 0 : index
    %158 = vector.load %arg3[%c0_40, %c160, %c0_41] : memref<1x256x128xbf16, #tpu.memory_space<vmem>>, vector<1x32x64xbf16>
    %159 = vector.shape_cast %158 : vector<1x32x64xbf16> to vector<32x64xbf16>
    %c0_42 = arith.constant 0 : index
    %c192 = arith.constant 192 : index
    %c0_43 = arith.constant 0 : index
    %160 = vector.load %arg3[%c0_42, %c192, %c0_43] : memref<1x256x128xbf16, #tpu.memory_space<vmem>>, vector<1x64x32xbf16>
    %161 = vector.shape_cast %160 : vector<1x64x32xbf16> to vector<64x32xbf16>
    %162 = arith.truncf %147 : vector<16x32xf32> to vector<16x32xbf16>
    %cst_44 = arith.constant dense<0.000000e+00> : vector<16x128xf32>
    %163 = tpu.matmul %162, %157, %cst_44 {dimension_numbers = #tpu.dot_dimension_numbers<[1], [0], [0], [1], [0, 0, 1, 1], [], []>} : vector<16x32xbf16>, vector<32x128xbf16>, vector<16x128xf32> -> vector<16x128xf32>
    %164 = vector.broadcast %148 : vector<1x128xf32> to vector<16x128xf32>
    %165 = arith.addf %163, %164 : vector<16x128xf32>
    %166 = vector.extract_strided_slice %165 {offsets = [0, 0], sizes = [16, 16], strides = [1, 1]} : vector<16x128xf32> to vector<16x16xf32>
    %167 = vector.extract_strided_slice %165 {offsets = [0, 16], sizes = [16, 16], strides = [1, 1]} : vector<16x128xf32> to vector<16x16xf32>
    %168 = tpu.concatenate %166, %167 in 0 : vector<16x16xf32>, vector<16x16xf32> -> vector<32x16xf32>
    %169 = vector.extract_strided_slice %165 {offsets = [0, 32], sizes = [16, 16], strides = [1, 1]} : vector<16x128xf32> to vector<16x16xf32>
    %170 = vector.extract_strided_slice %165 {offsets = [0, 48], sizes = [16, 16], strides = [1, 1]} : vector<16x128xf32> to vector<16x16xf32>
    %171 = tpu.concatenate %169, %170 in 0 : vector<16x16xf32>, vector<16x16xf32> -> vector<32x16xf32>
    %172 = vector.extract_strided_slice %165 {offsets = [0, 64], sizes = [16, 32], strides = [1, 1]} : vector<16x128xf32> to vector<16x32xf32>
    %173 = vector.extract_strided_slice %165 {offsets = [0, 96], sizes = [16, 32], strides = [1, 1]} : vector<16x128xf32> to vector<16x32xf32>
    %174 = tpu.concatenate %172, %173 in 0 : vector<16x32xf32>, vector<16x32xf32> -> vector<32x32xf32>
    %175 = arith.truncf %168 : vector<32x16xf32> to vector<32x16xbf16>
    %176 = arith.truncf %171 : vector<32x16xf32> to vector<32x16xbf16>
    %177 = tpu.transpose %176, [1, 0] : vector<32x16xbf16> -> vector<16x32xbf16>
    %cst_45 = arith.constant dense<0.000000e+00> : vector<32x32xf32>
    %178 = tpu.matmul %175, %177, %cst_45 {dimension_numbers = #tpu.dot_dimension_numbers<[1], [0], [0], [1], [0, 0, 1, 1], [], []>} : vector<32x16xbf16>, vector<16x32xbf16>, vector<32x32xf32> -> vector<32x32xf32>
    %cst_46 = arith.constant 2.500000e-01 : f32
    %179 = vector.broadcast %cst_46 : f32 to vector<32x32xf32>
    %180 = arith.mulf %178, %179 : vector<32x32xf32>
    %181 = arith.addf %180, %2 : vector<32x32xf32>
    %cst_47 = arith.constant dense<0xFF800000> : vector<32xf32>
    %182 = vector.multi_reduction <maximumf>, %181, %cst_47 [1] : vector<32x32xf32> to vector<32xf32>
    %183 = vector.shape_cast %182 : vector<32xf32> to vector<32x1xf32>
    %184 = vector.broadcast %183 : vector<32x1xf32> to vector<32x32xf32>
    %185 = arith.subf %181, %184 : vector<32x32xf32>
    %186 = math.exp %185 : vector<32x32xf32>
    %cst_48 = arith.constant dense<0.000000e+00> : vector<32xf32>
    %187 = vector.multi_reduction <add>, %186, %cst_48 [1] : vector<32x32xf32> to vector<32xf32>
    %188 = vector.shape_cast %187 : vector<32xf32> to vector<32x1xf32>
    %189 = tpu.reciprocal %188 {approx = true} : vector<32x1xf32> -> vector<32x1xf32>
    %190 = vector.broadcast %189 : vector<32x1xf32> to vector<32x32xf32>
    %191 = arith.mulf %186, %190 : vector<32x32xf32>
    %192 = arith.truncf %191 : vector<32x32xf32> to vector<32x32xbf16>
    %193 = arith.truncf %174 : vector<32x32xf32> to vector<32x32xbf16>
    %cst_49 = arith.constant dense<0.000000e+00> : vector<32x32xf32>
    %194 = tpu.matmul %192, %193, %cst_49 {dimension_numbers = #tpu.dot_dimension_numbers<[1], [0], [0], [1], [0, 0, 1, 1], [], []>} : vector<32x32xbf16>, vector<32x32xbf16>, vector<32x32xf32> -> vector<32x32xf32>
    %195 = vector.extract_strided_slice %194 {offsets = [0, 0], sizes = [16, 32], strides = [1, 1]} : vector<32x32xf32> to vector<16x32xf32>
    %196 = vector.broadcast %149 : vector<1x32xf32> to vector<16x32xf32>
    %197 = arith.addf %196, %195 : vector<16x32xf32>
    %198 = vector.extract_strided_slice %194 {offsets = [16, 0], sizes = [16, 32], strides = [1, 1]} : vector<32x32xf32> to vector<16x32xf32>
    %199 = arith.addf %197, %198 : vector<16x32xf32>
    %200 = arith.addf %147, %199 : vector<16x32xf32>
    %cst_50 = arith.constant dense<0.000000e+00> : vector<16xf32>
    %201 = vector.multi_reduction <add>, %200, %cst_50 [1] : vector<16x32xf32> to vector<16xf32>
    %202 = vector.shape_cast %201 : vector<16xf32> to vector<16x1xf32>
    %cst_51 = arith.constant 3.200000e+01 : f32
    %203 = vector.broadcast %cst_51 : f32 to vector<16x1xf32>
    %204 = arith.divf %202, %203 : vector<16x1xf32>
    %205 = vector.broadcast %204 : vector<16x1xf32> to vector<16x32xf32>
    %206 = arith.subf %200, %205 : vector<16x32xf32>
    %207 = arith.mulf %206, %206 : vector<16x32xf32>
    %cst_52 = arith.constant dense<0.000000e+00> : vector<16xf32>
    %208 = vector.multi_reduction <add>, %207, %cst_52 [1] : vector<16x32xf32> to vector<16xf32>
    %209 = vector.shape_cast %208 : vector<16xf32> to vector<16x1xf32>
    %cst_53 = arith.constant 3.200000e+01 : f32
    %210 = vector.broadcast %cst_53 : f32 to vector<16x1xf32>
    %211 = arith.divf %209, %210 : vector<16x1xf32>
    %212 = vector.broadcast %204 : vector<16x1xf32> to vector<16x32xf32>
    %213 = arith.subf %200, %212 : vector<16x32xf32>
    %cst_54 = arith.constant 9.99999996E-13 : f32
    %214 = vector.broadcast %cst_54 : f32 to vector<16x1xf32>
    %215 = arith.addf %211, %214 : vector<16x1xf32>
    %216 = math.rsqrt %215 : vector<16x1xf32>
    %217 = vector.broadcast %216 : vector<16x1xf32> to vector<16x32xf32>
    %218 = arith.mulf %213, %217 : vector<16x32xf32>
    %219 = vector.broadcast %150 : vector<1x32xf32> to vector<16x32xf32>
    %220 = arith.mulf %218, %219 : vector<16x32xf32>
    %221 = vector.broadcast %151 : vector<1x32xf32> to vector<16x32xf32>
    %222 = arith.addf %220, %221 : vector<16x32xf32>
    %223 = arith.truncf %222 : vector<16x32xf32> to vector<16x32xbf16>
    %cst_55 = arith.constant dense<0.000000e+00> : vector<16x64xf32>
    %224 = tpu.matmul %223, %159, %cst_55 {dimension_numbers = #tpu.dot_dimension_numbers<[1], [0], [0], [1], [0, 0, 1, 1], [], []>} : vector<16x32xbf16>, vector<32x64xbf16>, vector<16x64xf32> -> vector<16x64xf32>
    %225 = vector.broadcast %152 : vector<1x64xf32> to vector<16x64xf32>
    %226 = arith.addf %224, %225 : vector<16x64xf32>
    %227 = arith.mulf %226, %226 : vector<16x64xf32>
    %228 = arith.mulf %226, %227 : vector<16x64xf32>
    %cst_56 = arith.constant 4.471500e-02 : f32
    %229 = vector.broadcast %cst_56 : f32 to vector<16x64xf32>
    %230 = arith.mulf %229, %228 : vector<16x64xf32>
    %231 = arith.addf %226, %230 : vector<16x64xf32>
    %cst_57 = arith.constant 0.797884583 : f32
    %232 = vector.broadcast %cst_57 : f32 to vector<16x64xf32>
    %233 = arith.mulf %232, %231 : vector<16x64xf32>
    %234 = math.tanh %233 : vector<16x64xf32>
    %cst_58 = arith.constant 1.000000e+00 : f32
    %235 = vector.broadcast %cst_58 : f32 to vector<16x64xf32>
    %236 = arith.addf %235, %234 : vector<16x64xf32>
    %cst_59 = arith.constant 5.000000e-01 : f32
    %237 = vector.broadcast %cst_59 : f32 to vector<16x64xf32>
    %238 = arith.mulf %237, %236 : vector<16x64xf32>
    %239 = arith.mulf %226, %238 : vector<16x64xf32>
    %240 = arith.truncf %239 : vector<16x64xf32> to vector<16x64xbf16>
    %cst_60 = arith.constant dense<0.000000e+00> : vector<16x32xf32>
    %241 = tpu.matmul %240, %161, %cst_60 {dimension_numbers = #tpu.dot_dimension_numbers<[1], [0], [0], [1], [0, 0, 1, 1], [], []>} : vector<16x64xbf16>, vector<64x32xbf16>, vector<16x32xf32> -> vector<16x32xf32>
    %242 = vector.broadcast %153 : vector<1x32xf32> to vector<16x32xf32>
    %243 = arith.addf %241, %242 : vector<16x32xf32>
    %244 = arith.addf %222, %243 : vector<16x32xf32>
    %cst_61 = arith.constant dense<0.000000e+00> : vector<16xf32>
    %245 = vector.multi_reduction <add>, %244, %cst_61 [1] : vector<16x32xf32> to vector<16xf32>
    %246 = vector.shape_cast %245 : vector<16xf32> to vector<16x1xf32>
    %cst_62 = arith.constant 3.200000e+01 : f32
    %247 = vector.broadcast %cst_62 : f32 to vector<16x1xf32>
    %248 = arith.divf %246, %247 : vector<16x1xf32>
    %249 = vector.broadcast %248 : vector<16x1xf32> to vector<16x32xf32>
    %250 = arith.subf %244, %249 : vector<16x32xf32>
    %251 = arith.mulf %250, %250 : vector<16x32xf32>
    %cst_63 = arith.constant dense<0.000000e+00> : vector<16xf32>
    %252 = vector.multi_reduction <add>, %251, %cst_63 [1] : vector<16x32xf32> to vector<16xf32>
    %253 = vector.shape_cast %252 : vector<16xf32> to vector<16x1xf32>
    %cst_64 = arith.constant 3.200000e+01 : f32
    %254 = vector.broadcast %cst_64 : f32 to vector<16x1xf32>
    %255 = arith.divf %253, %254 : vector<16x1xf32>
    %256 = vector.broadcast %248 : vector<16x1xf32> to vector<16x32xf32>
    %257 = arith.subf %244, %256 : vector<16x32xf32>
    %cst_65 = arith.constant 9.99999996E-13 : f32
    %258 = vector.broadcast %cst_65 : f32 to vector<16x1xf32>
    %259 = arith.addf %255, %258 : vector<16x1xf32>
    %260 = math.rsqrt %259 : vector<16x1xf32>
    %261 = vector.broadcast %260 : vector<16x1xf32> to vector<16x32xf32>
    %262 = arith.mulf %257, %261 : vector<16x32xf32>
    %263 = vector.broadcast %154 : vector<1x32xf32> to vector<16x32xf32>
    %264 = arith.mulf %262, %263 : vector<16x32xf32>
    %265 = vector.broadcast %155 : vector<1x32xf32> to vector<16x32xf32>
    %266 = arith.addf %264, %265 : vector<16x32xf32>
    %c0_66 = arith.constant 0 : index
    %c0_67 = arith.constant 0 : index
    %c0_68 = arith.constant 0 : index
    %267 = vector.load %arg4[%c0_66, %c0_67, %c0_68] : memref<1x16x32xf32, #tpu.memory_space<vmem>>, vector<1x16x32xf32>
    %268 = vector.shape_cast %267 : vector<1x16x32xf32> to vector<16x32xf32>
    %269 = vector.shape_cast %266 : vector<16x32xf32> to vector<1x16x32xf32>
    tpu.vector_store %arg4[%c0_66, %c0_67, %c0_68], %269 {strides = array<i32>} : memref<1x16x32xf32, #tpu.memory_space<vmem>>, vector<1x16x32xf32>,
    return
  }
  func.func @transform_0(%arg0: i32) -> (i32, i32, i32) {
    %c0_i32 = arith.constant 0 : i32
    %c0_i32_0 = arith.constant 0 : i32
    %c0_i32_1 = arith.constant 0 : i32
    return %arg0, %c0_i32, %c0_i32_0 : i32, i32, i32
  }
  func.func @transform_1(%arg0: i32) -> (i32, i32, i32) {
    %c0_i32 = arith.constant 0 : i32
    %c0_i32_0 = arith.constant 0 : i32
    %c0_i32_1 = arith.constant 0 : i32
    return %arg0, %c0_i32, %c0_i32_0 : i32, i32, i32
  }
  func.func @transform_2(%arg0: i32) -> (i32, i32, i32) {
    %c0_i32 = arith.constant 0 : i32
    %c0_i32_0 = arith.constant 0 : i32
    %c0_i32_1 = arith.constant 0 : i32
    return %arg0, %c0_i32, %c0_i32_0 : i32, i32, i32
  }
  func.func @transform_3(%arg0: i32) -> (i32, i32, i32) {
    %c0_i32 = arith.constant 0 : i32
    %c0_i32_0 = arith.constant 0 : i32
    %c0_i32_1 = arith.constant 0 : i32
    return %arg0, %c0_i32, %c0_i32_0 : i32, i32, i32
  }
}

</mosaic_0001>

<llo_original>
// kernel: dual_encoder_forward.1
$region0: #{dual_encoder_forward.1}
  #allocation0 [shape = 'u32[]', space=smem, size = 0x4, offset = 0x4, fixed_abs, tag = 'smem constant byte address 0x4 - core index']
  #allocation1 [shape = 'u32[144,128]{1,0:T(1,128)}', space=vmem, size = 0x12000, scoped, tag = 'internal scratch']
  %s0 = inlined_call_operand.vmem [shape: f32[2,16,32], index: 0, kind: input, shape index: {}]
  %s1 = inlined_call_operand.vmem [shape: f32[2,56,128], index: 1, kind: input, shape index: {}]
  %s2 = inlined_call_operand.vmem [shape: bf16[2,256,128], index: 2, kind: input, shape index: {}]
  %s3 = inlined_call_operand.vmem [shape: f32[2,16,32], index: 3, kind: output, shape index: {}]
  %s4 = sld [smem:[#allocation0]]
  $region45: #{dual_encoder_forward.1} parent=0
    _
  %s6 = ssub.s32 1, %s4
  %s7 = scalar_select 0, %s6, %s4
  loop: start=0, step=1, limit=4
  $region2: #{dual_encoder_forward.1} parent=0 // loop_pre_header
    _
  $region3: #{dual_encoder_forward.1} parent=0 // loop_header
    %s9 = sphi 0, %s13
    %p10 = scmp.ge.s32.totalorder %s9, 4
    %s19 = sphi 0, %s21
    %s22 = sphi 0, %s19
    %s23 = sphi 0, %s22
    %s39 = sphi 0, %s23
    %s45 = sphi 0, %s47
    %s48 = sphi 0, %s45
    %s49 = sphi 0, %s48
    %s65 = sphi 0, %s49
    %s71 = sphi 0, %s73
    %s74 = sphi 0, %s71
    %s75 = sphi 0, %s74
    %s91 = sphi 0, %s75
    %s97 = sphi 0, %s99
    %s100 = sphi 0, %s97
    %s101 = sphi 0, %s100
    %s117 = sphi 0, %s101
  $region4: #{dual_encoder_forward.1} parent=0 // loop_header_branch
    %12 = sbr.rel (%p10) target = $region8
  $region5: #{dual_encoder_forward.1} parent=0 // loop_body
    %s14 = ssub.s32 %s9, 1
    %s15 = ssub.s32 %s9, 2
    %s16 = sadd.s32 %s9, 1
    %s17 = ssub.s32 %s9, %s16
    %p18 = scmp.eq.s32.totalorder %s17, 0
    %s20 = sadd.s32 %s19, 1
    %s21 = scalar_select %p18, %s19, %s20
    %p24 = pneg %p18
    %p25 = scmp.eq.s32.totalorder %s9, 1
    %p26 = por %p24, %p25
    %p27 = scmp.ne.s32.totalorder %s19, %s22
    %p28 = scmp.eq.s32.totalorder %s9, 0
    %p29 = por %p27, %p28
    %p30 = scmp.ne.s32.totalorder %s19, %s22
    %p31 = scmp.eq.s32.totalorder %s14, 1
    %p32 = por %p30, %p31
    %p33 = scmp.ne.s32.totalorder %s22, %s23
    %p34 = scmp.eq.s32.totalorder %s14, 0
    %p35 = por %p33, %p34
    %p36 = scmp.ne.s32.totalorder %s22, %s23
    %p37 = scmp.eq.s32.totalorder %s15, 1
    %p38 = por %p36, %p37
    %p40 = scmp.ne.s32.totalorder %s23, %s39
    %p41 = scmp.eq.s32.totalorder %s15, 0
    %p42 = por %p40, %p41
    %s43 = ssub.s32 %s9, %s16
    %p44 = scmp.eq.s32.totalorder %s43, 0
    %s46 = sadd.s32 %s45, 1
    %s47 = scalar_select %p44, %s45, %s46
    %p50 = pneg %p44
    %p51 = scmp.eq.s32.totalorder %s9, 1
    %p52 = por %p50, %p51
    %p53 = scmp.ne.s32.totalorder %s45, %s48
    %p54 = scmp.eq.s32.totalorder %s9, 0
    %p55 = por %p53, %p54
    %p56 = scmp.ne.s32.totalorder %s45, %s48
    %p57 = scmp.eq.s32.totalorder %s14, 1
    %p58 = por %p56, %p57
    %p59 = scmp.ne.s32.totalorder %s48, %s49
    %p60 = scmp.eq.s32.totalorder %s14, 0
    %p61 = por %p59, %p60
    %p62 = scmp.ne.s32.totalorder %s48, %s49
    %p63 = scmp.eq.s32.totalorder %s15, 1
    %p64 = por %p62, %p63
    %p66 = scmp.ne.s32.totalorder %s49, %s65
    %p67 = scmp.eq.s32.totalorder %s15, 0
    %p68 = por %p66, %p67
    %s69 = ssub.s32 %s9, %s16
    %p70 = scmp.eq.s32.totalorder %s69, 0
    %s72 = sadd.s32 %s71, 1
    %s73 = scalar_select %p70, %s71, %s72
    %p76 = pneg %p70
    %p77 = scmp.eq.s32.totalorder %s9, 1
    %p78 = por %p76, %p77
    %p79 = scmp.ne.s32.totalorder %s71, %s74
    %p80 = scmp.eq.s32.totalorder %s9, 0
    %p81 = por %p79, %p80
    %p82 = scmp.ne.s32.totalorder %s71, %s74
    %p83 = scmp.eq.s32.totalorder %s14, 1
    %p84 = por %p82, %p83
    %p85 = scmp.ne.s32.totalorder %s74, %s75
    %p86 = scmp.eq.s32.totalorder %s14, 0
    %p87 = por %p85, %p86
    %p88 = scmp.ne.s32.totalorder %s74, %s75
    %p89 = scmp.eq.s32.totalorder %s15, 1
    %p90 = por %p88, %p89
    %p92 = scmp.ne.s32.totalorder %s75, %s91
    %p93 = scmp.eq.s32.totalorder %s15, 0
    %p94 = por %p92, %p93
    %s95 = ssub.s32 %s9, %s16
    %p96 = scmp.eq.s32.totalorder %s95, 0
    %s98 = sadd.s32 %s97, 1
    %s99 = scalar_select %p96, %s97, %s98
    %p102 = pneg %p96
    %p103 = scmp.eq.s32.totalorder %s9, 1
    %p104 = por %p102, %p103
    %p105 = scmp.ne.s32.totalorder %s97, %s100
    %p106 = scmp.eq.s32.totalorder %s9, 0
    %p107 = por %p105, %p106
    %p108 = scmp.ne.s32.totalorder %s97, %s100
    %p109 = scmp.eq.s32.totalorder %s14, 1
    %p110 = por %p108, %p109
    %p111 = scmp.ne.s32.totalorder %s100, %s101
    %p112 = scmp.eq.s32.totalorder %s14, 0
    %p113 = por %p111, %p112
    %p114 = scmp.ne.s32.totalorder %s100, %s101
    %p115 = scmp.eq.s32.totalorder %s15, 1
    %p116 = por %p114, %p115
    %p118 = scmp.ne.s32.totalorder %s101, %s117
    %p119 = scmp.eq.s32.totalorder %s15, 0
    %p120 = por %p118, %p119
    %p121 = scmp.le.s32.totalorder 1, %s9
    %p122 = scmp.lt.s32.totalorder %s9, 3
    %p123 = pnand %p121, %p122
    %p124 = pneg %p123
    // Predicated region
    $region9: #{dual_encoder_forward.1} parent=5 // pred_check
      _
    $region10: #{dual_encoder_forward.1} parent=5 // pred_check_branch
      %126 = sbr.rel (%p123) target = $region12
    $region11: #{dual_encoder_forward.1} parent=5 // pred_region
      %s127 = ssub.s32 %s9, 1
    $region12: #{dual_encoder_forward.1} parent=5 // pred_fallthru
      _
    %p128 = scmp.lt.s32.totalorder %s9, 2
    // Predicated region
    $region13: #{dual_encoder_forward.1} parent=5 // pred_check
      %p129 = pneg %p128
    $region14: #{dual_encoder_forward.1} parent=5 // pred_check_branch
      %131 = sbr.rel (%p129) target = $region16
    $region15: #{dual_encoder_forward.1} parent=5 // pred_region
      // Predicated region
      $region17: #{dual_encoder_forward.1} parent=15 // pred_check
        %p132 = pneg %p29
      $region18: #{dual_encoder_forward.1} parent=15 // pred_check_branch
        %134 = sbr.rel (%p132) target = $region20
      $region19: #{dual_encoder_forward.1} parent=15 // pred_region
        %p135 = scmp.lt.s32.totalorder %s9, 1
        %s136 = scalar_select %p135, %s9, 1
        %s137 = smul.addr %s136, 2
        %s138 = smul.addr %s137, 8
        %s139 = scalar_lea.vmem %s0, %s138
      $region20: #{dual_encoder_forward.1} parent=15 // pred_fallthru
        _
      // Predicated region
      $region21: #{dual_encoder_forward.1} parent=15 // pred_check
        %p140 = pneg %p55
      $region22: #{dual_encoder_forward.1} parent=15 // pred_check_branch
        %142 = sbr.rel (%p140) target = $region24
      $region23: #{dual_encoder_forward.1} parent=15 // pred_region
        %p143 = scmp.lt.s32.totalorder %s9, 1
        %s144 = scalar_select %p143, %s9, 1
        %s145 = smul.addr %s144, 7
        %s146 = smul.addr %s145, 8
        %s147 = scalar_lea.vmem %s1, %s146
      $region24: #{dual_encoder_forward.1} parent=15 // pred_fallthru
        _
      // Predicated region
      $region25: #{dual_encoder_forward.1} parent=15 // pred_check
        %p148 = pneg %p81
      $region26: #{dual_encoder_forward.1} parent=15 // pred_check_branch
        %150 = sbr.rel (%p148) target = $region28
      $region27: #{dual_encoder_forward.1} parent=15 // pred_region
        %p151 = scmp.lt.s32.totalorder %s9, 1
        %s152 = scalar_select %p151, %s9, 1
        %s153 = smul.addr %s152, 32
        %s154 = smul.addr %s153, 4
        %s155 = scalar_lea.vmem %s2, %s154
      $region28: #{dual_encoder_forward.1} parent=15 // pred_fallthru
        _
    $region16: #{dual_encoder_forward.1} parent=5 // pred_fallthru
      _
    %p156 = scmp.le.s32.totalorder 1, %s9
    %p157 = scmp.lt.s32.totalorder %s9, 3
    %p158 = pnand %p156, %p157
    %p159 = pneg %p158
    // Predicated region
    $region29: #{dual_encoder_forward.1} parent=5 // pred_check
      _
    $region30: #{dual_encoder_forward.1} parent=5 // pred_check_branch
      %161 = sbr.rel (%p158) target = $region32
    $region31: #{dual_encoder_forward.1} parent=5 // pred_region
      %s162 = ssub.s32 %s9, 1
      %p163 = scmp.lt.s32.totalorder %s14, 1
      %s164 = scalar_select %p163, %s14, 1
      %s165 = smul.addr %s164, 2
      %s166 = smul.addr %s165, 8
      %s167 = scalar_lea.vmem %s0, %s166
      %p168 = pneg %p35
      %p169 = pneg %p32
      %p170 = scmp.lt.s32.totalorder %s14, 1
      %s171 = scalar_select %p170, %s14, 1
      %s172 = smul.addr %s171, 7
      %s173 = smul.addr %s172, 8
      %s174 = scalar_lea.vmem %s1, %s173
      %p175 = pneg %p61
      %p176 = pneg %p58
      %p177 = scmp.lt.s32.totalorder %s14, 1
      %s178 = scalar_select %p177, %s14, 1
      %s179 = smul.addr %s178, 32
      %s180 = smul.addr %s179, 4
      %s181 = scalar_lea.vmem %s2, %s180
      %p182 = pneg %p87
      %p183 = pneg %p84
      %p184 = pneg %p113
      %p185 = pneg %p110
      %p186 = scmp.lt.s32.totalorder %s14, 1
      %s187 = scalar_select %p186, %s14, 1
      %s188 = smul.addr %s187, 2
      %s189 = smul.addr %s188, 8
      %s190 = scalar_lea.vmem %s3, %s189
      %p191 = scmp.lt.s32.totalorder %s14, 1
      %s192 = scalar_select %p191, %s14, 1
      %s193 = smul.addr %s192, 2
      %s194 = smul.addr %s193, 8
      %s195 = scalar_lea.vmem %s0, %s194
      %p196 = scmp.lt.s32.totalorder %s14, 1
      %s197 = scalar_select %p196, %s14, 1
      %s198 = smul.addr %s197, 7
      %s199 = smul.addr %s198, 8
      %s200 = scalar_lea.vmem %s1, %s199
      %p201 = scmp.lt.s32.totalorder %s14, 1
      %s202 = scalar_select %p201, %s14, 1
      %s203 = smul.addr %s202, 32
      %s204 = smul.addr %s203, 4
      %s205 = scalar_lea.vmem %s2, %s204
      %p206 = scmp.lt.s32.totalorder %s14, 1
      %s207 = scalar_select %p206, %s14, 1
      %s208 = smul.addr %s207, 2
      %s209 = smul.addr %s208, 8
      %s210 = scalar_lea.vmem %s3, %s209
      %v212 = vld [vmem:[%s200] sm:$0xff]
      %v213 = vld [vmem:[%s200 + $0x8] sm:$0xff]
      %v214 = vld [vmem:[%s200 + $0x10] sm:$0xff]
      %v215 = vld [vmem:[%s200 + $0x18] sm:$0xff]
      %v216 = vld [vmem:[%s200 + $0x20] sm:$0xff]
      %v217 = vld [vmem:[%s200 + $0x28] sm:$0xff]
      %v218 = vld [vmem:[%s200 + $0x30] sm:$0xff]
      %v219 = vld [vmem:[%s195] sm:$0xff]
      %v220 = vld [vmem:[%s195 + $0x8] sm:$0xff]
      %vm221 = vcmask 261120
      %v222 = vsel %vm221, %v219, 0.0
      %223 = vadd.xlane.f32.xlu0 %v222
      %v224 = vpop.xlane.xlu0 %223
      %v225 = vsel %vm221, %v220, 0.0
      %226 = vadd.xlane.f32.xlu0 %v225
      %v227 = vpop.xlane.xlu0 %226
      %v228 = vrcp.pop 32.0
      %v229 = vmul.f32 %v224, %v228
      %v230 = vmul.f32 %v227, %v228
      %v231 = vsub.f32 %v219, %v229
      %v232 = vsub.f32 %v220, %v230
      %v233 = vmul.f32 %v231, %v231
      %v234 = vmul.f32 %v232, %v232
      %v235 = vsel %vm221, %v233, 0.0
      %236 = vadd.xlane.f32.xlu0 %v235
      %v237 = vpop.xlane.xlu0 %236
      %v238 = vsel %vm221, %v234, 0.0
      %239 = vadd.xlane.f32.xlu0 %v238
      %v240 = vpop.xlane.xlu0 %239
      %v241 = vmul.f32 %v237, %v228
      %v242 = vmul.f32 %v240, %v228
      %v243 = vadd.f32 %v241, 1e-12
      %v244 = vadd.f32 %v242, 1e-12
      %v245 = vrsqrt.pop %v243
      %v246 = vrsqrt.pop %v244
      %v247 = vmul.f32 %v231, %v245
      %v248 = vmul.f32 %v232, %v246
      %v249 = vlaneseq
      %v250 = vshrl.u32 %v249, 7
      %v251 = vsub.s32 0, %v250
      %v252 = vrot.slane %v212, %v251
      %v253 = vmul.f32 %v247, %v252
      %v254 = vmul.f32 %v248, %v252
      %v255 = vlaneseq
      %v256 = vshrl.u32 %v255, 7
      %v257 = vsub.s32 1, %v256
      %v258 = vrot.slane %v212, %v257
      %v259 = vadd.f32 %v253, %v258
      %v260 = vadd.f32 %v254, %v258
      %v261 = vld [vmem:[%s205] sm:$0xf]
      %v262 = vld [vmem:[%s205 + $0x4] sm:$0xf]
      %v263 = vld [vmem:[%s205 + $0x8] sm:$0xf]
      %v264 = vld [vmem:[%s205 + $0xc] sm:$0xf]
      %v265 = vld [vmem:[%s205 + $0x10] sm:$0xf]
      %v266 = vld [vmem:[%s205 + $0x14] sm:$0xf]
      %v267 = vld [vmem:[%s205 + $0x18] sm:$0xf]
      %v268 = vld [vmem:[%s205 + $0x1c] sm:$0xf]
      %v269 = vld [vmem:[%s205 + $0x20] sm:$0xf]
      %v270 = vld [vmem:[%s205 + $0x24] sm:$0xf]
      %v271 = vld [vmem:[%s205 + $0x28] sm:$0xf]
      %v272 = vld [vmem:[%s205 + $0x2c] sm:$0xf]
      %v273 = vld [vmem:[%s205 + $0x30] sm:$0xf]
      %v274 = vld [vmem:[%s205 + $0x34] sm:$0xf]
      %v275 = vld [vmem:[%s205 + $0x38] sm:$0xf]
      %v276 = vld [vmem:[%s205 + $0x3c] sm:$0xf]
      %v277 = vpack.c.bf16 %v260, %v259
      %v278 = vlaneseq
      %v279 = vshrl.u32 %v278, 7
      %v280 = vsub.s32 2, %v279
      %v281 = vrot.slane %v212, %v280
      %v286 = vunpack.c.l.b16 %v261
      %v287 = vunpack.c.l.b16 %v262
      %v288 = vunpack.c.l.b16 %v263
      %v289 = vunpack.c.l.b16 %v264
      %v290 = vpack.c.b16 %v287, %v286
      %v291 = vpack.c.b16 %v289, %v288
      %v295 = vsel %vm221, %v277, 0
      %297 = vmatprep.subr.bf16.mxu0 0
      %298 = vmatpush1.bf16.msra.mxu0 0
      %299 = vmatprep.subr.bf16.mxu0 0
      %300 = vmatpush1.bf16.msra.mxu0 0
      %301 = vmatprep.subr.bf16.mxu0 0
      %302 = vmatpush1.bf16.msra.mxu0 0
      %303 = vmatprep.subr.bf16.mxu0 0
      %304 = vmatpush1.bf16.msra.mxu0 0
      %305 = vmatprep.subr.bf16.mxu0 0
      %306 = vmatpush1.bf16.msra.mxu0 0
      %307 = vmatprep.subr.bf16.mxu0 0
      %308 = vmatpush1.bf16.msra.mxu0 0
      %309 = vmatprep.subr.bf16.mxu0 0
      %310 = vmatpush1.bf16.msra.mxu0 %v291
      %311 = vmatprep.subr.bf16.mxu0 0
      %312 = vmatpush1.bf16.msra.mxu0 %v290
      %313 = vmatprep.subr.bf16.mxu0 0
      %314 = vmatpush2.bf16.msra.mxu0 0
      %315 = vmatprep.subr.bf16.mxu0 0
      %316 = vmatpush2.bf16.msra.mxu0 0
      %317 = vmatprep.subr.bf16.mxu0 0
      %318 = vmatpush2.bf16.msra.mxu0 0
      %319 = vmatprep.subr.bf16.mxu0 0
      %320 = vmatpush2.bf16.msra.mxu0 0
      %321 = vmatprep.subr.bf16.mxu0 0
      %322 = vmatpush2.bf16.msra.mxu0 0
      %323 = vmatprep.subr.bf16.mxu0 0
      %324 = vmatpush2.bf16.msra.mxu0 0
      %325 = vmatprep.subr.bf16.mxu0 0
      %326 = vmatpush2.bf16.msra.mxu0 0
      %327 = vmatprep.subr.bf16.mxu0 0
      %328 = vmatpush2.bf16.msra.mxu0 0
      %329 = vmatprep.mubr.bf16.mxu0 0
      %330 = vmatmul.mubr.bf16.gmra.mxu0 %v295
      %v331 = vpop.f32.mrf.mxu0
      %v332 = vadd.f32 %v281, %v331
      %v333 = vpop.f32.mrf.mxu0
      %v334 = vpop.f32.mrf.mxu0
      %v335 = vadd.f32 %v281, %v334
      %v336 = vpop.f32.mrf.mxu0
      %337 = vdwg.mxu0
      %340 = vrot.lane.b32.xlu0 %v332, 112
      %v341 = vpop.permute.xlu0 %340
      %342 = vrot.lane.b32.xlu0 %v335, 112
      %v343 = vpop.permute.xlu0 %342
      %346 = vrot.lane.b32.xlu0 %v332, 96
      %v347 = vpop.permute.xlu0 %346
      %348 = vrot.lane.b32.xlu0 %v335, 96
      %v349 = vpop.permute.xlu0 %348
      %v352 = vpack.c.bf16 %v335, %v332
      %v353 = vpack.c.bf16 %v343, %v341
      %356 = vrot.lane.b32.xlu0 %v352, 96
      %v357 = vpop.permute.xlu0 %356
      %358 = vrot.lane.b32.xlu0 %v353, 96
      %v359 = vpop.permute.xlu0 %358
      %vm360 = vcmask 130048
      %v362 = vsel %vm360, %v352, 0
      %v365 = vsel %vm360, %v353, 0
      %v368 = vsel %vm360, %v357, 0
      %v371 = vsel %vm360, %v359, 0
      %373 = vmatprep.subr.bf16.mxu0 0
      %374 = vmatpush1.bf16.xpose.msra.mxu0 0
      %375 = vmatprep.subr.bf16.mxu0 0
      %376 = vmatpush1.bf16.xpose.msra.mxu0 0
      %377 = vmatprep.subr.bf16.mxu0 0
      %378 = vmatpush1.bf16.xpose.msra.mxu0 0
      %379 = vmatprep.subr.bf16.mxu0 0
      %380 = vmatpush1.bf16.xpose.msra.mxu0 0
      %381 = vmatprep.subr.bf16.mxu0 0
      %382 = vmatpush1.bf16.xpose.msra.mxu0 0
      %383 = vmatprep.subr.bf16.mxu0 0
      %384 = vmatpush1.bf16.xpose.msra.mxu0 0
      %385 = vmatprep.subr.bf16.mxu0 0
      %386 = vmatpush1.bf16.xpose.msra.mxu0 %v371
      %387 = vmatprep.subr.bf16.mxu0 0
      %388 = vmatpush1.bf16.xpose.msra.mxu0 %v368
      %389 = vmatprep.subr.bf16.mxu0 0
      %390 = vmatpush2.bf16.xpose.msra.mxu0 0
      %391 = vmatprep.subr.bf16.mxu0 0
      %392 = vmatpush2.bf16.xpose.msra.mxu0 0
      %393 = vmatprep.subr.bf16.mxu0 0
      %394 = vmatpush2.bf16.xpose.msra.mxu0 0
      %395 = vmatprep.subr.bf16.mxu0 0
      %396 = vmatpush2.bf16.xpose.msra.mxu0 0
      %397 = vmatprep.subr.bf16.mxu0 0
      %398 = vmatpush2.bf16.xpose.msra.mxu0 0
      %399 = vmatprep.subr.bf16.mxu0 0
      %400 = vmatpush2.bf16.xpose.msra.mxu0 0
      %401 = vmatprep.subr.bf16.mxu0 0
      %402 = vmatpush2.bf16.xpose.msra.mxu0 0
      %403 = vmatprep.subr.bf16.mxu0 0
      %404 = vmatpush2.bf16.xpose.msra.mxu0 0
      %405 = vmatprep.mubr.bf16.mxu0 0
      %406 = vmatmul.mubr.bf16.gmra.mxu0 %v362
      %v407 = vpop.f32.mrf.mxu0
      %v408 = vadd.f32 0.0, %v407
      %v409 = vpop.f32.mrf.mxu0
      %v410 = vpop.f32.mrf.mxu0
      %v411 = vadd.f32 0.0, %v410
      %v412 = vpop.f32.mrf.mxu0
      %413 = vmatprep.mubr.bf16.mxu0 0
      %414 = vmatmul.mubr.bf16.gmra.mxu0 %v365
      %v415 = vpop.f32.mrf.mxu0
      %v416 = vadd.f32 0.0, %v415
      %v417 = vpop.f32.mrf.mxu0
      %v418 = vpop.f32.mrf.mxu0
      %v419 = vadd.f32 0.0, %v418
      %v420 = vpop.f32.mrf.mxu0
      %421 = vdwg.mxu0
      %v422 = vmul.f32 %v408, 0.25
      %v423 = vmul.f32 %v411, 0.25
      %v424 = vmul.f32 %v416, 0.25
      %v425 = vmul.f32 %v419, 0.25
      %v426 = vadd.f32 %v422, %v215
      %v427 = vadd.f32 %v423, %v216
      %v428 = vadd.f32 %v424, %v217
      %v429 = vadd.f32 %v425, %v218
      %v430 = vsel %vm221, %v426, -inf
      %431 = vmax.xlane.f32.xlu0 %v430
      %v432 = vpop.xlane.xlu0 %431
      %v433 = vsel %vm221, %v427, -inf
      %434 = vmax.xlane.f32.xlu0 %v433
      %v435 = vpop.xlane.xlu0 %434
      %v436 = vsel %vm221, %v428, -inf
      %437 = vmax.xlane.f32.xlu0 %v436
      %v438 = vpop.xlane.xlu0 %437
      %v439 = vsel %vm221, %v429, -inf
      %440 = vmax.xlane.f32.xlu0 %v439
      %v441 = vpop.xlane.xlu0 %440
      %v442 = vsub.f32 %v426, %v432
      %v443 = vsub.f32 %v427, %v435
      %v444 = vsub.f32 %v428, %v438
      %v445 = vsub.f32 %v429, %v441
      %v446 = vmul.f32 %v442, 1.442695
      %v447 = vpow.pop %v446
      %v448 = vmul.f32 %v443, 1.442695
      %v449 = vpow.pop %v448
      %v450 = vmul.f32 %v444, 1.442695
      %v451 = vpow.pop %v450
      %v452 = vmul.f32 %v445, 1.442695
      %v453 = vpow.pop %v452
      %v454 = vsel %vm221, %v447, 0.0
      %455 = vadd.xlane.f32.xlu0 %v454
      %v456 = vpop.xlane.xlu0 %455
      %v457 = vsel %vm221, %v449, 0.0
      %458 = vadd.xlane.f32.xlu0 %v457
      %v459 = vpop.xlane.xlu0 %458
      %v460 = vsel %vm221, %v451, 0.0
      %461 = vadd.xlane.f32.xlu0 %v460
      %v462 = vpop.xlane.xlu0 %461
      %v463 = vsel %vm221, %v453, 0.0
      %464 = vadd.xlane.f32.xlu0 %v463
      %v465 = vpop.xlane.xlu0 %464
      %v466 = vrcp.pop %v456
      %v467 = vrcp.pop %v459
      %v468 = vrcp.pop %v462
      %v469 = vrcp.pop %v465
      %v470 = vmul.f32 %v447, %v466
      %v471 = vmul.f32 %v449, %v467
      %v472 = vmul.f32 %v451, %v468
      %v473 = vmul.f32 %v453, %v469
      %v474 = vpack.c.bf16 %v471, %v470
      %v475 = vpack.c.bf16 %v473, %v472
      %v476 = vpack.c.bf16 %v349, %v347
      %478 = vrot.lane.b32.xlu0 %v352, 64
      %v479 = vpop.permute.xlu0 %478
      %480 = vrot.lane.b32.xlu0 %v476, 64
      %v481 = vpop.permute.xlu0 %480
      %v485 = vsel %vm221, %v474, 0
      %v488 = vsel %vm221, %v475, 0
      %490 = vmatprep.subr.bf16.mxu0 0
      %491 = vmatpush1.bf16.msra.mxu0 0
      %492 = vmatprep.subr.bf16.mxu0 0
      %493 = vmatpush1.bf16.msra.mxu0 0
      %494 = vmatprep.subr.bf16.mxu0 0
      %495 = vmatpush1.bf16.msra.mxu0 0
      %496 = vmatprep.subr.bf16.mxu0 0
      %497 = vmatpush1.bf16.msra.mxu0 0
      %498 = vmatprep.subr.bf16.mxu0 0
      %499 = vmatpush1.bf16.msra.mxu0 0
      %500 = vmatprep.subr.bf16.mxu0 0
      %501 = vmatpush1.bf16.msra.mxu0 0
      %502 = vmatprep.subr.bf16.mxu0 0
      %503 = vmatpush1.bf16.msra.mxu0 %v481
      %504 = vmatprep.subr.bf16.mxu0 0
      %505 = vmatpush1.bf16.msra.mxu0 %v479
      %506 = vmatprep.subr.bf16.mxu0 0
      %507 = vmatpush2.bf16.msra.mxu0 0
      %508 = vmatprep.subr.bf16.mxu0 0
      %509 = vmatpush2.bf16.msra.mxu0 0
      %510 = vmatprep.subr.bf16.mxu0 0
      %511 = vmatpush2.bf16.msra.mxu0 0
      %512 = vmatprep.subr.bf16.mxu0 0
      %513 = vmatpush2.bf16.msra.mxu0 0
      %514 = vmatprep.subr.bf16.mxu0 0
      %515 = vmatpush2.bf16.msra.mxu0 0
      %516 = vmatprep.subr.bf16.mxu0 0
      %517 = vmatpush2.bf16.msra.mxu0 0
      %518 = vmatprep.subr.bf16.mxu0 0
      %519 = vmatpush2.bf16.msra.mxu0 0
      %520 = vmatprep.subr.bf16.mxu0 0
      %521 = vmatpush2.bf16.msra.mxu0 0
      %522 = vmatprep.mubr.bf16.mxu0 0
      %523 = vmatmul.mubr.bf16.gmra.mxu0 %v485
      %v524 = vpop.f32.mrf.mxu0
      %v525 = vadd.f32 0.0, %v524
      %v526 = vpop.f32.mrf.mxu0
      %v527 = vpop.f32.mrf.mxu0
      %v528 = vadd.f32 0.0, %v527
      %v529 = vpop.f32.mrf.mxu0
      %530 = vmatprep.mubr.bf16.mxu0 0
      %531 = vmatmul.mubr.bf16.gmra.mxu0 %v488
      %v532 = vpop.f32.mrf.mxu0
      %v533 = vadd.f32 0.0, %v532
      %v534 = vpop.f32.mrf.mxu0
      %v535 = vpop.f32.mrf.mxu0
      %v536 = vadd.f32 0.0, %v535
      %v537 = vpop.f32.mrf.mxu0
      %538 = vdwg.mxu0
      %v539 = vlaneseq
      %v540 = vshrl.u32 %v539, 7
      %v541 = vsub.s32 3, %v540
      %v542 = vrot.slane %v212, %v541
      %v543 = vadd.f32 %v542, %v525
      %v544 = vadd.f32 %v542, %v528
      %v545 = vadd.f32 %v543, %v533
      %v546 = vadd.f32 %v544, %v536
      %v547 = vadd.f32 %v259, %v545
      %v548 = vadd.f32 %v260, %v546
      %v549 = vsel %vm221, %v547, 0.0
      %550 = vadd.xlane.f32.xlu0 %v549
      %v551 = vpop.xlane.xlu0 %550
      %v552 = vsel %vm221, %v548, 0.0
      %553 = vadd.xlane.f32.xlu0 %v552
      %v554 = vpop.xlane.xlu0 %553
      %v555 = vmul.f32 %v551, %v228
      %v556 = vmul.f32 %v554, %v228
      %v557 = vsub.f32 %v547, %v555
      %v558 = vsub.f32 %v548, %v556
      %v559 = vmul.f32 %v557, %v557
      %v560 = vmul.f32 %v558, %v558
      %v561 = vsel %vm221, %v559, 0.0
      %562 = vadd.xlane.f32.xlu0 %v561
      %v563 = vpop.xlane.xlu0 %562
      %v564 = vsel %vm221, %v560, 0.0
      %565 = vadd.xlane.f32.xlu0 %v564
      %v566 = vpop.xlane.xlu0 %565
      %v567 = vmul.f32 %v563, %v228
      %v568 = vmul.f32 %v566, %v228
      %v569 = vadd.f32 %v567, 1e-12
      %v570 = vadd.f32 %v568, 1e-12
      %v571 = vrsqrt.pop %v569
      %v572 = vrsqrt.pop %v570
      %v573 = vmul.f32 %v557, %v571
      %v574 = vmul.f32 %v558, %v572
      %v575 = vlaneseq
      %v576 = vshrl.u32 %v575, 7
      %v577 = vsub.s32 4, %v576
      %v578 = vrot.slane %v212, %v577
      %v579 = vmul.f32 %v573, %v578
      %v580 = vmul.f32 %v574, %v578
      %v581 = vlaneseq
      %v582 = vshrl.u32 %v581, 7
      %v583 = vsub.s32 5, %v582
      %v584 = vrot.slane %v212, %v583
      %v585 = vadd.f32 %v579, %v584
      %v586 = vadd.f32 %v580, %v584
      %v587 = vpack.c.bf16 %v586, %v585
      %v588 = vlaneseq
      %v589 = vshrl.u32 %v588, 7
      %v590 = vsub.s32 6, %v589
      %v591 = vrot.slane %v212, %v590
      %v596 = vunpack.c.l.b16 %v265
      %v597 = vunpack.c.l.b16 %v266
      %v598 = vunpack.c.l.b16 %v267
      %v599 = vunpack.c.l.b16 %v268
      %v600 = vpack.c.b16 %v597, %v596
      %v601 = vpack.c.b16 %v599, %v598
      %v605 = vsel %vm221, %v587, 0
      %607 = vmatprep.subr.bf16.mxu0 0
      %608 = vmatpush1.bf16.msra.mxu0 0
      %609 = vmatprep.subr.bf16.mxu0 0
      %610 = vmatpush1.bf16.msra.mxu0 0
      %611 = vmatprep.subr.bf16.mxu0 0
      %612 = vmatpush1.bf16.msra.mxu0 0
      %613 = vmatprep.subr.bf16.mxu0 0
      %614 = vmatpush1.bf16.msra.mxu0 0
      %615 = vmatprep.subr.bf16.mxu0 0
      %616 = vmatpush1.bf16.msra.mxu0 0
      %617 = vmatprep.subr.bf16.mxu0 0
      %618 = vmatpush1.bf16.msra.mxu0 0
      %619 = vmatprep.subr.bf16.mxu0 0
      %620 = vmatpush1.bf16.msra.mxu0 %v601
      %621 = vmatprep.subr.bf16.mxu0 0
      %622 = vmatpush1.bf16.msra.mxu0 %v600
      %623 = vmatprep.subr.bf16.mxu0 0
      %624 = vmatpush2.bf16.msra.mxu0 0
      %625 = vmatprep.subr.bf16.mxu0 0
      %626 = vmatpush2.bf16.msra.mxu0 0
      %627 = vmatprep.subr.bf16.mxu0 0
      %628 = vmatpush2.bf16.msra.mxu0 0
      %629 = vmatprep.subr.bf16.mxu0 0
      %630 = vmatpush2.bf16.msra.mxu0 0
      %631 = vmatprep.subr.bf16.mxu0 0
      %632 = vmatpush2.bf16.msra.mxu0 0
      %633 = vmatprep.subr.bf16.mxu0 0
      %634 = vmatpush2.bf16.msra.mxu0 0
      %635 = vmatprep.subr.bf16.mxu0 0
      %636 = vmatpush2.bf16.msra.mxu0 0
      %637 = vmatprep.subr.bf16.mxu0 0
      %638 = vmatpush2.bf16.msra.mxu0 0
      %639 = vmatprep.mubr.bf16.mxu0 0
      %640 = vmatmul.mubr.bf16.gmra.mxu0 %v605
      %v641 = vpop.f32.mrf.mxu0
      %v642 = vadd.f32 %v591, %v641
      %v643 = vpop.f32.mrf.mxu0
      %v644 = vpop.f32.mrf.mxu0
      %v645 = vadd.f32 %v591, %v644
      %v646 = vpop.f32.mrf.mxu0
      %647 = vdwg.mxu0
      %v648 = vmul.f32 %v642, %v642
      %v649 = vmul.f32 %v645, %v645
      %v650 = vmul.f32 %v642, %v648
      %v651 = vmul.f32 %v645, %v649
      %v652 = vmul.f32 %v650, 0.044715
      %v653 = vmul.f32 %v651, 0.044715
      %v654 = vadd.f32 %v642, %v652
      %v655 = vadd.f32 %v645, %v653
      %v656 = vmul.f32 %v654, 0.7978846
      %v657 = vmul.f32 %v655, 0.7978846
      %v658 = vtanh.pop %v656
      %v659 = vtanh.pop %v657
      %v660 = vadd.f32 %v658, 1.0
      %v661 = vadd.f32 %v659, 1.0
      %v662 = vmul.f32 %v660, 0.5
      %v663 = vmul.f32 %v661, 0.5
      %v664 = vmul.f32 %v642, %v662
      %v665 = vmul.f32 %v645, %v663
      %v666 = vpack.c.bf16 %v665, %v664
      %v667 = vlaneseq
      %v668 = vshrl.u32 %v667, 7
      %v669 = vsub.s32 7, %v668
      %v670 = vrot.slane %v212, %v669
      %v679 = vunpack.c.l.b16 %v269
      %v680 = vunpack.c.l.b16 %v270
      %v681 = vunpack.c.l.b16 %v271
      %v682 = vunpack.c.l.b16 %v272
      %v683 = vunpack.c.l.b16 %v273
      %v684 = vunpack.c.l.b16 %v274
      %v685 = vunpack.c.l.b16 %v275
      %v686 = vunpack.c.l.b16 %v276
      %v687 = vpack.c.b16 %v680, %v679
      %v688 = vpack.c.b16 %v682, %v681
      %v689 = vpack.c.b16 %v684, %v683
      %v690 = vpack.c.b16 %v686, %v685
      %vm695 = vcmask 523264
      %v697 = vsel %vm695, %v666, 0
      %699 = vmatprep.subr.bf16.mxu0 0
      %700 = vmatpush1.bf16.msra.mxu0 0
      %701 = vmatprep.subr.bf16.mxu0 0
      %702 = vmatpush1.bf16.msra.mxu0 0
      %703 = vmatprep.subr.bf16.mxu0 0
      %704 = vmatpush1.bf16.msra.mxu0 0
      %705 = vmatprep.subr.bf16.mxu0 0
      %706 = vmatpush1.bf16.msra.mxu0 0
      %707 = vmatprep.subr.bf16.mxu0 0
      %708 = vmatpush1.bf16.msra.mxu0 %v690
      %709 = vmatprep.subr.bf16.mxu0 0
      %710 = vmatpush1.bf16.msra.mxu0 %v689
      %711 = vmatprep.subr.bf16.mxu0 0
      %712 = vmatpush1.bf16.msra.mxu0 %v688
      %713 = vmatprep.subr.bf16.mxu0 0
      %714 = vmatpush1.bf16.msra.mxu0 %v687
      %715 = vmatprep.subr.bf16.mxu0 0
      %716 = vmatpush2.bf16.msra.mxu0 0
      %717 = vmatprep.subr.bf16.mxu0 0
      %718 = vmatpush2.bf16.msra.mxu0 0
      %719 = vmatprep.subr.bf16.mxu0 0
      %720 = vmatpush2.bf16.msra.mxu0 0
      %721 = vmatprep.subr.bf16.mxu0 0
      %722 = vmatpush2.bf16.msra.mxu0 0
      %723 = vmatprep.subr.bf16.mxu0 0
      %724 = vmatpush2.bf16.msra.mxu0 0
      %725 = vmatprep.subr.bf16.mxu0 0
      %726 = vmatpush2.bf16.msra.mxu0 0
      %727 = vmatprep.subr.bf16.mxu0 0
      %728 = vmatpush2.bf16.msra.mxu0 0
      %729 = vmatprep.subr.bf16.mxu0 0
      %730 = vmatpush2.bf16.msra.mxu0 0
      %731 = vmatprep.mubr.bf16.mxu0 0
      %732 = vmatmul.mubr.bf16.gmra.mxu0 %v697
      %v733 = vpop.f32.mrf.mxu0
      %v734 = vadd.f32 %v670, %v733
      %v735 = vpop.f32.mrf.mxu0
      %v736 = vpop.f32.mrf.mxu0
      %v737 = vadd.f32 %v670, %v736
      %v738 = vpop.f32.mrf.mxu0
      %739 = vdwg.mxu0
      %v740 = vadd.f32 %v585, %v734
      %v741 = vadd.f32 %v586, %v737
      %v742 = vsel %vm221, %v740, 0.0
      %743 = vadd.xlane.f32.xlu0 %v742
      %v744 = vpop.xlane.xlu0 %743
      %v745 = vsel %vm221, %v741, 0.0
      %746 = vadd.xlane.f32.xlu0 %v745
      %v747 = vpop.xlane.xlu0 %746
      %v748 = vmul.f32 %v744, %v228
      %v749 = vmul.f32 %v747, %v228
      %v750 = vsub.f32 %v740, %v748
      %v751 = vsub.f32 %v741, %v749
      %v752 = vmul.f32 %v750, %v750
      %v753 = vmul.f32 %v751, %v751
      %v754 = vsel %vm221, %v752, 0.0
      %755 = vadd.xlane.f32.xlu0 %v754
      %v756 = vpop.xlane.xlu0 %755
      %v757 = vsel %vm221, %v753, 0.0
      %758 = vadd.xlane.f32.xlu0 %v757
      %v759 = vpop.xlane.xlu0 %758
      %v760 = vmul.f32 %v756, %v228
      %v761 = vmul.f32 %v759, %v228
      %v762 = vadd.f32 %v760, 1e-12
      %v763 = vadd.f32 %v761, 1e-12
      %v764 = vrsqrt.pop %v762
      %v765 = vrsqrt.pop %v763
      %v766 = vmul.f32 %v750, %v764
      %v767 = vmul.f32 %v751, %v765
      %v768 = vlaneseq
      %v769 = vshrl.u32 %v768, 7
      %v770 = vsub.s32 0, %v769
      %v771 = vrot.slane %v213, %v770
      %v772 = vmul.f32 %v766, %v771
      %v773 = vmul.f32 %v767, %v771
      %v774 = vlaneseq
      %v775 = vshrl.u32 %v774, 7
      %v776 = vsub.s32 1, %v775
      %v777 = vrot.slane %v213, %v776
      %v778 = vadd.f32 %v772, %v777
      %v779 = vadd.f32 %v773, %v777
      %v780 = vld [vmem:[%s205 + $0x40] sm:$0xf]
      %v781 = vld [vmem:[%s205 + $0x44] sm:$0xf]
      %v782 = vld [vmem:[%s205 + $0x48] sm:$0xf]
      %v783 = vld [vmem:[%s205 + $0x4c] sm:$0xf]
      %v784 = vld [vmem:[%s205 + $0x50] sm:$0xf]
      %v785 = vld [vmem:[%s205 + $0x54] sm:$0xf]
      %v786 = vld [vmem:[%s205 + $0x58] sm:$0xf]
      %v787 = vld [vmem:[%s205 + $0x5c] sm:$0xf]
      %v788 = vld [vmem:[%s205 + $0x60] sm:$0xf]
      %v789 = vld [vmem:[%s205 + $0x64] sm:$0xf]
      %v790 = vld [vmem:[%s205 + $0x68] sm:$0xf]
      %v791 = vld [vmem:[%s205 + $0x6c] sm:$0xf]
      %v792 = vld [vmem:[%s205 + $0x70] sm:$0xf]
      %v793 = vld [vmem:[%s205 + $0x74] sm:$0xf]
      %v794 = vld [vmem:[%s205 + $0x78] sm:$0xf]
      %v795 = vld [vmem:[%s205 + $0x7c] sm:$0xf]
      %v796 = vpack.c.bf16 %v779, %v778
      %v797 = vlaneseq
      %v798 = vshrl.u32 %v797, 7
      %v799 = vsub.s32 2, %v798
      %v800 = vrot.slane %v213, %v799
      %v805 = vunpack.c.l.b16 %v780
      %v806 = vunpack.c.l.b16 %v781
      %v807 = vunpack.c.l.b16 %v782
      %v808 = vunpack.c.l.b16 %v783
      %v809 = vpack.c.b16 %v806, %v805
      %v810 = vpack.c.b16 %v808, %v807
      %v814 = vsel %vm221, %v796, 0
      %816 = vmatprep.subr.bf16.mxu0 0
      %817 = vmatpush1.bf16.msra.mxu0 0
      %818 = vmatprep.subr.bf16.mxu0 0
      %819 = vmatpush1.bf16.msra.mxu0 0
      %820 = vmatprep.subr.bf16.mxu0 0
      %821 = vmatpush1.bf16.msra.mxu0 0
      %822 = vmatprep.subr.bf16.mxu0 0
      %823 = vmatpush1.bf16.msra.mxu0 0
      %824 = vmatprep.subr.bf16.mxu0 0
      %825 = vmatpush1.bf16.msra.mxu0 0
      %826 = vmatprep.subr.bf16.mxu0 0
      %827 = vmatpush1.bf16.msra.mxu0 0
      %828 = vmatprep.subr.bf16.mxu0 0
      %829 = vmatpush1.bf16.msra.mxu0 %v810
      %830 = vmatprep.subr.bf16.mxu0 0
      %831 = vmatpush1.bf16.msra.mxu0 %v809
      %832 = vmatprep.subr.bf16.mxu0 0
      %833 = vmatpush2.bf16.msra.mxu0 0
      %834 = vmatprep.subr.bf16.mxu0 0
      %835 = vmatpush2.bf16.msra.mxu0 0
      %836 = vmatprep.subr.bf16.mxu0 0
      %837 = vmatpush2.bf16.msra.mxu0 0
      %838 = vmatprep.subr.bf16.mxu0 0
      %839 = vmatpush2.bf16.msra.mxu0 0
      %840 = vmatprep.subr.bf16.mxu0 0
      %841 = vmatpush2.bf16.msra.mxu0 0
      %842 = vmatprep.subr.bf16.mxu0 0
      %843 = vmatpush2.bf16.msra.mxu0 0
      %844 = vmatprep.subr.bf16.mxu0 0
      %845 = vmatpush2.bf16.msra.mxu0 0
      %846 = vmatprep.subr.bf16.mxu0 0
      %847 = vmatpush2.bf16.msra.mxu0 0
      %848 = vmatprep.mubr.bf16.mxu0 0
      %849 = vmatmul.mubr.bf16.gmra.mxu0 %v814
      %v850 = vpop.f32.mrf.mxu0
      %v851 = vadd.f32 %v800, %v850
      %v852 = vpop.f32.mrf.mxu0
      %v853 = vpop.f32.mrf.mxu0
      %v854 = vadd.f32 %v800, %v853
      %v855 = vpop.f32.mrf.mxu0
      %856 = vdwg.mxu0
      %859 = vrot.lane.b32.xlu0 %v851, 112
      %v860 = vpop.permute.xlu0 %859
      %861 = vrot.lane.b32.xlu0 %v854, 112
      %v862 = vpop.permute.xlu0 %861
      %865 = vrot.lane.b32.xlu0 %v851, 96
      %v866 = vpop.permute.xlu0 %865
      %867 = vrot.lane.b32.xlu0 %v854, 96
      %v868 = vpop.permute.xlu0 %867
      %v871 = vpack.c.bf16 %v854, %v851
      %v872 = vpack.c.bf16 %v862, %v860
      %875 = vrot.lane.b32.xlu0 %v871, 96
      %v876 = vpop.permute.xlu0 %875
      %877 = vrot.lane.b32.xlu0 %v872, 96
      %v878 = vpop.permute.xlu0 %877
      %v880 = vsel %vm360, %v871, 0
      %v883 = vsel %vm360, %v872, 0
      %v886 = vsel %vm360, %v876, 0
      %v889 = vsel %vm360, %v878, 0
      %891 = vmatprep.subr.bf16.mxu0 0
      %892 = vmatpush1.bf16.xpose.msra.mxu0 0
      %893 = vmatprep.subr.bf16.mxu0 0
      %894 = vmatpush1.bf16.xpose.msra.mxu0 0
      %895 = vmatprep.subr.bf16.mxu0 0
      %896 = vmatpush1.bf16.xpose.msra.mxu0 0
      %897 = vmatprep.subr.bf16.mxu0 0
      %898 = vmatpush1.bf16.xpose.msra.mxu0 0
      %899 = vmatprep.subr.bf16.mxu0 0
      %900 = vmatpush1.bf16.xpose.msra.mxu0 0
      %901 = vmatprep.subr.bf16.mxu0 0
      %902 = vmatpush1.bf16.xpose.msra.mxu0 0
      %903 = vmatprep.subr.bf16.mxu0 0
      %904 = vmatpush1.bf16.xpose.msra.mxu0 %v889
      %905 = vmatprep.subr.bf16.mxu0 0
      %906 = vmatpush1.bf16.xpose.msra.mxu0 %v886
      %907 = vmatprep.subr.bf16.mxu0 0
      %908 = vmatpush2.bf16.xpose.msra.mxu0 0
      %909 = vmatprep.subr.bf16.mxu0 0
      %910 = vmatpush2.bf16.xpose.msra.mxu0 0
      %911 = vmatprep.subr.bf16.mxu0 0
      %912 = vmatpush2.bf16.xpose.msra.mxu0 0
      %913 = vmatprep.subr.bf16.mxu0 0
      %914 = vmatpush2.bf16.xpose.msra.mxu0 0
      %915 = vmatprep.subr.bf16.mxu0 0
      %916 = vmatpush2.bf16.xpose.msra.mxu0 0
      %917 = vmatprep.subr.bf16.mxu0 0
      %918 = vmatpush2.bf16.xpose.msra.mxu0 0
      %919 = vmatprep.subr.bf16.mxu0 0
      %920 = vmatpush2.bf16.xpose.msra.mxu0 0
      %921 = vmatprep.subr.bf16.mxu0 0
      %922 = vmatpush2.bf16.xpose.msra.mxu0 0
      %923 = vmatprep.mubr.bf16.mxu0 0
      %924 = vmatmul.mubr.bf16.gmra.mxu0 %v880
      %v925 = vpop.f32.mrf.mxu0
      %v926 = vadd.f32 0.0, %v925
      %v927 = vpop.f32.mrf.mxu0
      %v928 = vpop.f32.mrf.mxu0
      %v929 = vadd.f32 0.0, %v928
      %v930 = vpop.f32.mrf.mxu0
      %931 = vmatprep.mubr.bf16.mxu0 0
      %932 = vmatmul.mubr.bf16.gmra.mxu0 %v883
      %v933 = vpop.f32.mrf.mxu0
      %v934 = vadd.f32 0.0, %v933
      %v935 = vpop.f32.mrf.mxu0
      %v936 = vpop.f32.mrf.mxu0
      %v937 = vadd.f32 0.0, %v936
      %v938 = vpop.f32.mrf.mxu0
      %939 = vdwg.mxu0
      %v940 = vmul.f32 %v926, 0.25
      %v941 = vmul.f32 %v929, 0.25
      %v942 = vmul.f32 %v934, 0.25
      %v943 = vmul.f32 %v937, 0.25
      %v944 = vadd.f32 %v940, %v215
      %v945 = vadd.f32 %v941, %v216
      %v946 = vadd.f32 %v942, %v217
      %v947 = vadd.f32 %v943, %v218
      %v948 = vsel %vm221, %v944, -inf
      %949 = vmax.xlane.f32.xlu0 %v948
      %v950 = vpop.xlane.xlu0 %949
      %v951 = vsel %vm221, %v945, -inf
      %952 = vmax.xlane.f32.xlu0 %v951
      %v953 = vpop.xlane.xlu0 %952
      %v954 = vsel %vm221, %v946, -inf
      %955 = vmax.xlane.f32.xlu0 %v954
      %v956 = vpop.xlane.xlu0 %955
      %v957 = vsel %vm221, %v947, -inf
      %958 = vmax.xlane.f32.xlu0 %v957
      %v959 = vpop.xlane.xlu0 %958
      %v960 = vsub.f32 %v944, %v950
      %v961 = vsub.f32 %v945, %v953
      %v962 = vsub.f32 %v946, %v956
      %v963 = vsub.f32 %v947, %v959
      %v964 = vmul.f32 %v960, 1.442695
      %v965 = vpow.pop %v964
      %v966 = vmul.f32 %v961, 1.442695
      %v967 = vpow.pop %v966
      %v968 = vmul.f32 %v962, 1.442695
      %v969 = vpow.pop %v968
      %v970 = vmul.f32 %v963, 1.442695
      %v971 = vpow.pop %v970
      %v972 = vsel %vm221, %v965, 0.0
      %973 = vadd.xlane.f32.xlu0 %v972
      %v974 = vpop.xlane.xlu0 %973
      %v975 = vsel %vm221, %v967, 0.0
      %976 = vadd.xlane.f32.xlu0 %v975
      %v977 = vpop.xlane.xlu0 %976
      %v978 = vsel %vm221, %v969, 0.0
      %979 = vadd.xlane.f32.xlu0 %v978
      %v980 = vpop.xlane.xlu0 %979
      %v981 = vsel %vm221, %v971, 0.0
      %982 = vadd.xlane.f32.xlu0 %v981
      %v983 = vpop.xlane.xlu0 %982
      %v984 = vrcp.pop %v974
      %v985 = vrcp.pop %v977
      %v986 = vrcp.pop %v980
      %v987 = vrcp.pop %v983
      %v988 = vmul.f32 %v965, %v984
      %v989 = vmul.f32 %v967, %v985
      %v990 = vmul.f32 %v969, %v986
      %v991 = vmul.f32 %v971, %v987
      %v992 = vpack.c.bf16 %v989, %v988
      %v993 = vpack.c.bf16 %v991, %v990
      %v994 = vpack.c.bf16 %v868, %v866
      %996 = vrot.lane.b32.xlu0 %v871, 64
      %v997 = vpop.permute.xlu0 %996
      %998 = vrot.lane.b32.xlu0 %v994, 64
      %v999 = vpop.permute.xlu0 %998
      %v1003 = vsel %vm221, %v992, 0
      %v1006 = vsel %vm221, %v993, 0
      %1008 = vmatprep.subr.bf16.mxu0 0
      %1009 = vmatpush1.bf16.msra.mxu0 0
      %1010 = vmatprep.subr.bf16.mxu0 0
      %1011 = vmatpush1.bf16.msra.mxu0 0
      %1012 = vmatprep.subr.bf16.mxu0 0
      %1013 = vmatpush1.bf16.msra.mxu0 0
      %1014 = vmatprep.subr.bf16.mxu0 0
      %1015 = vmatpush1.bf16.msra.mxu0 0
      %1016 = vmatprep.subr.bf16.mxu0 0
      %1017 = vmatpush1.bf16.msra.mxu0 0
      %1018 = vmatprep.subr.bf16.mxu0 0
      %1019 = vmatpush1.bf16.msra.mxu0 0
      %1020 = vmatprep.subr.bf16.mxu0 0
      %1021 = vmatpush1.bf16.msra.mxu0 %v999
      %1022 = vmatprep.subr.bf16.mxu0 0
      %1023 = vmatpush1.bf16.msra.mxu0 %v997
      %1024 = vmatprep.subr.bf16.mxu0 0
      %1025 = vmatpush2.bf16.msra.mxu0 0
      %1026 = vmatprep.subr.bf16.mxu0 0
      %1027 = vmatpush2.bf16.msra.mxu0 0
      %1028 = vmatprep.subr.bf16.mxu0 0
      %1029 = vmatpush2.bf16.msra.mxu0 0
      %1030 = vmatprep.subr.bf16.mxu0 0
      %1031 = vmatpush2.bf16.msra.mxu0 0
      %1032 = vmatprep.subr.bf16.mxu0 0
      %1033 = vmatpush2.bf16.msra.mxu0 0
      %1034 = vmatprep.subr.bf16.mxu0 0
      %1035 = vmatpush2.bf16.msra.mxu0 0
      %1036 = vmatprep.subr.bf16.mxu0 0
      %1037 = vmatpush2.bf16.msra.mxu0 0
      %1038 = vmatprep.subr.bf16.mxu0 0
      %1039 = vmatpush2.bf16.msra.mxu0 0
      %1040 = vmatprep.mubr.bf16.mxu0 0
      %1041 = vmatmul.mubr.bf16.gmra.mxu0 %v1003
      %v1042 = vpop.f32.mrf.mxu0
      %v1043 = vadd.f32 0.0, %v1042
      %v1044 = vpop.f32.mrf.mxu0
      %v1045 = vpop.f32.mrf.mxu0
      %v1046 = vadd.f32 0.0, %v1045
      %v1047 = vpop.f32.mrf.mxu0
      %1048 = vmatprep.mubr.bf16.mxu0 0
      %1049 = vmatmul.mubr.bf16.gmra.mxu0 %v1006
      %v1050 = vpop.f32.mrf.mxu0
      %v1051 = vadd.f32 0.0, %v1050
      %v1052 = vpop.f32.mrf.mxu0
      %v1053 = vpop.f32.mrf.mxu0
      %v1054 = vadd.f32 0.0, %v1053
      %v1055 = vpop.f32.mrf.mxu0
      %1056 = vdwg.mxu0
      %v1057 = vlaneseq
      %v1058 = vshrl.u32 %v1057, 7
      %v1059 = vsub.s32 3, %v1058
      %v1060 = vrot.slane %v213, %v1059
      %v1061 = vadd.f32 %v1060, %v1043
      %v1062 = vadd.f32 %v1060, %v1046
      %v1063 = vadd.f32 %v1061, %v1051
      %v1064 = vadd.f32 %v1062, %v1054
      %v1065 = vadd.f32 %v778, %v1063
      %v1066 = vadd.f32 %v779, %v1064
      %v1067 = vsel %vm221, %v1065, 0.0
      %1068 = vadd.xlane.f32.xlu0 %v1067
      %v1069 = vpop.xlane.xlu0 %1068
      %v1070 = vsel %vm221, %v1066, 0.0
      %1071 = vadd.xlane.f32.xlu0 %v1070
      %v1072 = vpop.xlane.xlu0 %1071
      %v1073 = vmul.f32 %v1069, %v228
      %v1074 = vmul.f32 %v1072, %v228
      %v1075 = vsub.f32 %v1065, %v1073
      %v1076 = vsub.f32 %v1066, %v1074
      %v1077 = vmul.f32 %v1075, %v1075
      %v1078 = vmul.f32 %v1076, %v1076
      %v1079 = vsel %vm221, %v1077, 0.0
      %1080 = vadd.xlane.f32.xlu0 %v1079
      %v1081 = vpop.xlane.xlu0 %1080
      %v1082 = vsel %vm221, %v1078, 0.0
      %1083 = vadd.xlane.f32.xlu0 %v1082
      %v1084 = vpop.xlane.xlu0 %1083
      %v1085 = vmul.f32 %v1081, %v228
      %v1086 = vmul.f32 %v1084, %v228
      %v1087 = vadd.f32 %v1085, 1e-12
      %v1088 = vadd.f32 %v1086, 1e-12
      %v1089 = vrsqrt.pop %v1087
      %v1090 = vrsqrt.pop %v1088
      %v1091 = vmul.f32 %v1075, %v1089
      %v1092 = vmul.f32 %v1076, %v1090
      %v1093 = vlaneseq
      %v1094 = vshrl.u32 %v1093, 7
      %v1095 = vsub.s32 4, %v1094
      %v1096 = vrot.slane %v213, %v1095
      %v1097 = vmul.f32 %v1091, %v1096
      %v1098 = vmul.f32 %v1092, %v1096
      %v1099 = vlaneseq
      %v1100 = vshrl.u32 %v1099, 7
      %v1101 = vsub.s32 5, %v1100
      %v1102 = vrot.slane %v213, %v1101
      %v1103 = vadd.f32 %v1097, %v1102
      %v1104 = vadd.f32 %v1098, %v1102
      %v1105 = vpack.c.bf16 %v1104, %v1103
      %v1106 = vlaneseq
      %v1107 = vshrl.u32 %v1106, 7
      %v1108 = vsub.s32 6, %v1107
      %v1109 = vrot.slane %v213, %v1108
      %v1114 = vunpack.c.l.b16 %v784
      %v1115 = vunpack.c.l.b16 %v785
      %v1116 = vunpack.c.l.b16 %v786
      %v1117 = vunpack.c.l.b16 %v787
      %v1118 = vpack.c.b16 %v1115, %v1114
      %v1119 = vpack.c.b16 %v1117, %v1116
      %v1123 = vsel %vm221, %v1105, 0
      %1125 = vmatprep.subr.bf16.mxu0 0
      %1126 = vmatpush1.bf16.msra.mxu0 0
      %1127 = vmatprep.subr.bf16.mxu0 0
      %1128 = vmatpush1.bf16.msra.mxu0 0
      %1129 = vmatprep.subr.bf16.mxu0 0
      %1130 = vmatpush1.bf16.msra.mxu0 0
      %1131 = vmatprep.subr.bf16.mxu0 0
      %1132 = vmatpush1.bf16.msra.mxu0 0
      %1133 = vmatprep.subr.bf16.mxu0 0
      %1134 = vmatpush1.bf16.msra.mxu0 0
      %1135 = vmatprep.subr.bf16.mxu0 0
      %1136 = vmatpush1.bf16.msra.mxu0 0
      %1137 = vmatprep.subr.bf16.mxu0 0
      %1138 = vmatpush1.bf16.msra.mxu0 %v1119
      %1139 = vmatprep.subr.bf16.mxu0 0
      %1140 = vmatpush1.bf16.msra.mxu0 %v1118
      %1141 = vmatprep.subr.bf16.mxu0 0
      %1142 = vmatpush2.bf16.msra.mxu0 0
      %1143 = vmatprep.subr.bf16.mxu0 0
      %1144 = vmatpush2.bf16.msra.mxu0 0
      %1145 = vmatprep.subr.bf16.mxu0 0
      %1146 = vmatpush2.bf16.msra.mxu0 0
      %1147 = vmatprep.subr.bf16.mxu0 0
      %1148 = vmatpush2.bf16.msra.mxu0 0
      %1149 = vmatprep.subr.bf16.mxu0 0
      %1150 = vmatpush2.bf16.msra.mxu0 0
      %1151 = vmatprep.subr.bf16.mxu0 0
      %1152 = vmatpush2.bf16.msra.mxu0 0
      %1153 = vmatprep.subr.bf16.mxu0 0
      %1154 = vmatpush2.bf16.msra.mxu0 0
      %1155 = vmatprep.subr.bf16.mxu0 0
      %1156 = vmatpush2.bf16.msra.mxu0 0
      %1157 = vmatprep.mubr.bf16.mxu0 0
      %1158 = vmatmul.mubr.bf16.gmra.mxu0 %v1123
      %v1159 = vpop.f32.mrf.mxu0
      %v1160 = vadd.f32 %v1109, %v1159
      %v1161 = vpop.f32.mrf.mxu0
      %v1162 = vpop.f32.mrf.mxu0
      %v1163 = vadd.f32 %v1109, %v1162
      %v1164 = vpop.f32.mrf.mxu0
      %1165 = vdwg.mxu0
      %v1166 = vmul.f32 %v1160, %v1160
      %v1167 = vmul.f32 %v1163, %v1163
      %v1168 = vmul.f32 %v1160, %v1166
      %v1169 = vmul.f32 %v1163, %v1167
      %v1170 = vmul.f32 %v1168, 0.044715
      %v1171 = vmul.f32 %v1169, 0.044715
      %v1172 = vadd.f32 %v1160, %v1170
      %v1173 = vadd.f32 %v1163, %v1171
      %v1174 = vmul.f32 %v1172, 0.7978846
      %v1175 = vmul.f32 %v1173, 0.7978846
      %v1176 = vtanh.pop %v1174
      %v1177 = vtanh.pop %v1175
      %v1178 = vadd.f32 %v1176, 1.0
      %v1179 = vadd.f32 %v1177, 1.0
      %v1180 = vmul.f32 %v1178, 0.5
      %v1181 = vmul.f32 %v1179, 0.5
      %v1182 = vmul.f32 %v1160, %v1180
      %v1183 = vmul.f32 %v1163, %v1181
      %v1184 = vpack.c.bf16 %v1183, %v1182
      %v1185 = vlaneseq
      %v1186 = vshrl.u32 %v1185, 7
      %v1187 = vsub.s32 7, %v1186
      %v1188 = vrot.slane %v213, %v1187
      %v1197 = vunpack.c.l.b16 %v788
      %v1198 = vunpack.c.l.b16 %v789
      %v1199 = vunpack.c.l.b16 %v790
      %v1200 = vunpack.c.l.b16 %v791
      %v1201 = vunpack.c.l.b16 %v792
      %v1202 = vunpack.c.l.b16 %v793
      %v1203 = vunpack.c.l.b16 %v794
      %v1204 = vunpack.c.l.b16 %v795
      %v1205 = vpack.c.b16 %v1198, %v1197
      %v1206 = vpack.c.b16 %v1200, %v1199
      %v1207 = vpack.c.b16 %v1202, %v1201
      %v1208 = vpack.c.b16 %v1204, %v1203
      %v1214 = vsel %vm695, %v1184, 0
      %1216 = vmatprep.subr.bf16.mxu0 0
      %1217 = vmatpush1.bf16.msra.mxu0 0
      %1218 = vmatprep.subr.bf16.mxu0 0
      %1219 = vmatpush1.bf16.msra.mxu0 0
      %1220 = vmatprep.subr.bf16.mxu0 0
      %1221 = vmatpush1.bf16.msra.mxu0 0
      %1222 = vmatprep.subr.bf16.mxu0 0
      %1223 = vmatpush1.bf16.msra.mxu0 0
      %1224 = vmatprep.subr.bf16.mxu0 0
      %1225 = vmatpush1.bf16.msra.mxu0 %v1208
      %1226 = vmatprep.subr.bf16.mxu0 0
      %1227 = vmatpush1.bf16.msra.mxu0 %v1207
      %1228 = vmatprep.subr.bf16.mxu0 0
      %1229 = vmatpush1.bf16.msra.mxu0 %v1206
      %1230 = vmatprep.subr.bf16.mxu0 0
      %1231 = vmatpush1.bf16.msra.mxu0 %v1205
      %1232 = vmatprep.subr.bf16.mxu0 0
      %1233 = vmatpush2.bf16.msra.mxu0 0
      %1234 = vmatprep.subr.bf16.mxu0 0
      %1235 = vmatpush2.bf16.msra.mxu0 0
      %1236 = vmatprep.subr.bf16.mxu0 0
      %1237 = vmatpush2.bf16.msra.mxu0 0
      %1238 = vmatprep.subr.bf16.mxu0 0
      %1239 = vmatpush2.bf16.msra.mxu0 0
      %1240 = vmatprep.subr.bf16.mxu0 0
      %1241 = vmatpush2.bf16.msra.mxu0 0
      %1242 = vmatprep.subr.bf16.mxu0 0
      %1243 = vmatpush2.bf16.msra.mxu0 0
      %1244 = vmatprep.subr.bf16.mxu0 0
      %1245 = vmatpush2.bf16.msra.mxu0 0
      %1246 = vmatprep.subr.bf16.mxu0 0
      %1247 = vmatpush2.bf16.msra.mxu0 0
      %1248 = vmatprep.mubr.bf16.mxu0 0
      %1249 = vmatmul.mubr.bf16.gmra.mxu0 %v1214
      %v1250 = vpop.f32.mrf.mxu0
      %v1251 = vadd.f32 %v1188, %v1250
      %v1252 = vpop.f32.mrf.mxu0
      %v1253 = vpop.f32.mrf.mxu0
      %v1254 = vadd.f32 %v1188, %v1253
      %v1255 = vpop.f32.mrf.mxu0
      %1256 = vdwg.mxu0
      %v1257 = vadd.f32 %v1103, %v1251
      %v1258 = vadd.f32 %v1104, %v1254
      %v1259 = vsel %vm221, %v1257, 0.0
      %1260 = vadd.xlane.f32.xlu0 %v1259
      %v1261 = vpop.xlane.xlu0 %1260
      %v1262 = vsel %vm221, %v1258, 0.0
      %1263 = vadd.xlane.f32.xlu0 %v1262
      %v1264 = vpop.xlane.xlu0 %1263
      %v1265 = vmul.f32 %v1261, %v228
      %v1266 = vmul.f32 %v1264, %v228
      %v1267 = vsub.f32 %v1257, %v1265
      %v1268 = vsub.f32 %v1258, %v1266
      %v1269 = vmul.f32 %v1267, %v1267
      %v1270 = vmul.f32 %v1268, %v1268
      %v1271 = vsel %vm221, %v1269, 0.0
      %1272 = vadd.xlane.f32.xlu0 %v1271
      %v1273 = vpop.xlane.xlu0 %1272
      %v1274 = vsel %vm221, %v1270, 0.0
      %1275 = vadd.xlane.f32.xlu0 %v1274
      %v1276 = vpop.xlane.xlu0 %1275
      %v1277 = vmul.f32 %v1273, %v228
      %v1278 = vmul.f32 %v1276, %v228
      %v1279 = vadd.f32 %v1277, 1e-12
      %v1280 = vadd.f32 %v1278, 1e-12
      %v1281 = vrsqrt.pop %v1279
      %v1282 = vrsqrt.pop %v1280
      %v1283 = vmul.f32 %v1267, %v1281
      %v1284 = vmul.f32 %v1268, %v1282
      %v1285 = vlaneseq
      %v1286 = vshrl.u32 %v1285, 7
      %v1287 = vsub.s32 0, %v1286
      %v1288 = vrot.slane %v214, %v1287
      %v1289 = vmul.f32 %v1283, %v1288
      %v1290 = vmul.f32 %v1284, %v1288
      %v1291 = vlaneseq
      %v1292 = vshrl.u32 %v1291, 7
      %v1293 = vsub.s32 1, %v1292
      %v1294 = vrot.slane %v214, %v1293
      %v1295 = vadd.f32 %v1289, %v1294
      %v1296 = vadd.f32 %v1290, %v1294
      %1297 = vst.msk [vmem:[%s210] sm:$0xff] %vm221, %v1295
      %1298 = vst.msk [vmem:[%s210 + $0x8] sm:$0xff] %vm221, %v1296
      %p1299 = scmp.lt.s32.totalorder %s14, 1
      %s1300 = scalar_select %p1299, %s14, 1
      %s1301 = smul.addr %s1300, 2
      %s1302 = smul.addr %s1301, 8
      %s1303 = scalar_lea.vmem %s3, %s1302
      // Predicated region
      $region33: #{dual_encoder_forward.1} parent=31 // pred_check
        %p1304 = pneg %p110
      $region34: #{dual_encoder_forward.1} parent=31 // pred_check_branch
        %1306 = sbr.rel (%p1304) target = $region36
      $region35: #{dual_encoder_forward.1} parent=31 // pred_region
        _
      $region36: #{dual_encoder_forward.1} parent=31 // pred_fallthru
        _
    $region32: #{dual_encoder_forward.1} parent=5 // pred_fallthru
      _
    %p1307 = scmp.le.s32.totalorder 2, %s9
    // Predicated region
    $region37: #{dual_encoder_forward.1} parent=5 // pred_check
      %p1308 = pneg %p1307
    $region38: #{dual_encoder_forward.1} parent=5 // pred_check_branch
      %1310 = sbr.rel (%p1308) target = $region40
    $region39: #{dual_encoder_forward.1} parent=5 // pred_region
      %s1311 = ssub.s32 %s9, 2
      // Predicated region
      $region41: #{dual_encoder_forward.1} parent=39 // pred_check
        %p1312 = pneg %p116
      $region42: #{dual_encoder_forward.1} parent=39 // pred_check_branch
        %1314 = sbr.rel (%p1312) target = $region44
      $region43: #{dual_encoder_forward.1} parent=39 // pred_region
        %p1315 = scmp.lt.s32.totalorder %s15, 1
        %s1316 = scalar_select %p1315, %s15, 1
        %s1317 = smul.addr %s1316, 2
        %s1318 = smul.addr %s1317, 8
        %s1319 = scalar_lea.vmem %s3, %s1318
      $region44: #{dual_encoder_forward.1} parent=39 // pred_fallthru
        _
    $region40: #{dual_encoder_forward.1} parent=5 // pred_fallthru
      _
  $region6: #{dual_encoder_forward.1} parent=0 // loop_footer
    %s13 = sadd.s32 1, %s9
  $region7: #{dual_encoder_forward.1} parent=0 // loop_footer_branch
    %8 = sbr.rel target = $region3
  $region8: #{dual_encoder_forward.1} parent=0 // loop_exit
    _

</llo_original>
